<compile_context>
chip_gen: v6e
topology: v6e:2x2x1
jax: 0.10.0
libtpu: 0.0.40
codegen_flags: <defaults>
</compile_context>

<pallas_src>
import functools

import jax
import jax.numpy as jnp
from jax import lax
from jax.experimental import pallas as pl
from jax.experimental.pallas import tpu as pltpu

EPS = 1e-5
EXPANSION = 4
LANE = 128
# Fits v5e/v6e (128 MiB physical) and v7x (64 MiB physical); well above the
# ~12-16 MiB the largest tile configuration below actually needs.
_VMEM_LIMIT = 40 * 1024 * 1024


def _round_up(x, m):
    return ((x + m - 1) // m) * m


def _pick_rows(m):
    """(row tile, padded rows): large sublane-dense tiles, <=12.5% pad waste."""
    m8 = _round_up(m, 8)
    for c in (1024, 512, 256, 128):
        if c <= m8 and (_round_up(m8, c) - m) * 8 <= m:
            return c, _round_up(m8, c)
    return m8, m8


def _pick_cols(n):
    if n % 256 == 0 and n >= 512:
        return 256
    if n % 128 == 0:
        return 128
    return n


def _pick_k(k):
    if k <= 1024:  # full-K single MXU pass: no accumulator RMW, no k axis
        return k
    for c in (1024, 768, 512, 384, 256, 128):
        if k % c == 0:
            return c
    return k


# ----------------------------------------------------------------------------
# Kernel A (single K block, 2-D grid, no scratch):
#   out = [relu]( x @ w_folded + bias [+ residual] )
# ----------------------------------------------------------------------------
def _mm_epilogue_kernel(*refs, apply_relu, has_residual):
    if has_residual:
        x_ref, w_ref, b_ref, r_ref, o_ref = refs
    else:
        x_ref, w_ref, b_ref, o_ref = refs
    y = jnp.dot(x_ref[...], w_ref[...], preferred_element_type=jnp.float32)
    y = y + b_ref[...]
    if has_residual:
        y = y + r_ref[...].astype(jnp.float32)
    if apply_relu:
        y = jnp.maximum(y, 0.0)
    o_ref[...] = y.astype(o_ref.dtype)


# ----------------------------------------------------------------------------
# Kernel B (K-tiled, 3-D grid, f32 accumulator in VMEM) -- only used for
# K > 1024 (the strided-conv im2col fallback).
# ----------------------------------------------------------------------------
def _mm_epilogue_acc_kernel(*refs, apply_relu, has_residual):
    if has_residual:
        x_ref, w_ref, b_ref, r_ref, o_ref, acc_ref = refs
    else:
        x_ref, w_ref, b_ref, o_ref, acc_ref = refs
    k = pl.program_id(2)

    @pl.when(k == 0)
    def _():
        acc_ref[...] = jnp.zeros_like(acc_ref)

    acc_ref[...] += jnp.dot(
        x_ref[...], w_ref[...], preferred_element_type=jnp.float32
    )

    @pl.when(k == pl.num_programs(2) - 1)
    def _():
        y = acc_ref[...] + b_ref[...]
        if has_residual:
            y = y + r_ref[...].astype(jnp.float32)
        if apply_relu:
            y = jnp.maximum(y, 0.0)
        o_ref[...] = y.astype(o_ref.dtype)


def fused_matmul_bn(x2d, w, bias, residual=None, apply_relu=True,
                    out_dtype=jnp.bfloat16):
    """x2d: [M, K] bf16, w: [K, N] bf16 (BN scale pre-folded), bias: [N] f32,
    residual: optional [M, N].  Rows are zero-padded to a tile multiple so
    every output tile is sublane/lane dense."""
    m, k = x2d.shape
    kw, n = w.shape
    assert k == kw

    tm, m_pad = _pick_rows(m)
    tn = _pick_cols(n)
    tk = _pick_k(k)
    if m_pad != m:
        x2d = jnp.pad(x2d, ((0, m_pad - m), (0, 0)))
        if residual is not None:
            residual = jnp.pad(residual, ((0, m_pad - m), (0, 0)))
    ni, nj, nk = m_pad // tm, n // tn, k // tk

    bias2d = bias.reshape(1, n).astype(jnp.float32)
    has_res = residual is not None

    if nk == 1:
        # Single MXU pass per output tile: no accumulator, no dead K axis.
        in_specs = [
            pl.BlockSpec((tm, k), lambda i, j: (i, 0)),
            pl.BlockSpec((k, tn), lambda i, j: (0, j)),
            pl.BlockSpec((1, tn), lambda i, j: (0, j)),
        ]
        args = [x2d, w, bias2d]
        if has_res:
            in_specs.append(pl.BlockSpec((tm, tn), lambda i, j: (i, j)))
            args.append(residual)
        kernel = functools.partial(
            _mm_epilogue_kernel, apply_relu=apply_relu, has_residual=has_res
        )
        grid = (ni, nj)
        out_spec = pl.BlockSpec((tm, tn), lambda i, j: (i, j))
        scratch = []
        dims = ("parallel", "parallel")
    else:
        in_specs = [
            pl.BlockSpec((tm, tk), lambda i, j, kk: (i, kk)),
            pl.BlockSpec((tk, tn), lambda i, j, kk: (kk, j)),
            pl.BlockSpec((1, tn), lambda i, j, kk: (0, j)),
        ]
        args = [x2d, w, bias2d]
        if has_res:
            in_specs.append(pl.BlockSpec((tm, tn), lambda i, j, kk: (i, j)))
            args.append(residual)
        kernel = functools.partial(
            _mm_epilogue_acc_kernel, apply_relu=apply_relu, has_residual=has_res
        )
        grid = (ni, nj, nk)
        out_spec = pl.BlockSpec((tm, tn), lambda i, j, kk: (i, j))
        scratch = [pltpu.VMEM((tm, tn), jnp.float32)]
        dims = ("parallel", "parallel", "arbitrary")

    out = pl.pallas_call(
        kernel,
        out_shape=jax.ShapeDtypeStruct((m_pad, n), out_dtype),
        grid_spec=pltpu.PrefetchScalarGridSpec(
            num_scalar_prefetch=0,
            grid=grid,
            in_specs=in_specs,
            out_specs=out_spec,
            scratch_shapes=scratch,
        ),
        compiler_params=pltpu.CompilerParams(
            dimension_semantics=dims, vmem_limit_bytes=_VMEM_LIMIT
        ),
    )(*args)
    return out[:m] if m_pad != m else out


# ----------------------------------------------------------------------------
# Direct 3x3 / stride-1 / pad-1 conv kernel (no materialized im2col).
# The padded image is row-flattened to [rows, C]; output at flat position r is
# the 9-tap 1-D conv  sum_t x[r + dh*Wp + dw] @ w_t.  Positions that wrap a row
# edge / fall in padding rows are computed and discarded afterwards.
# ----------------------------------------------------------------------------
def _conv3x3_kernel(x_hbm, w_ref, b_ref, o_ref, buf, sem, *, tm, rows, cin, wp,
                    apply_relu):
    n_inner = pl.num_programs(1)
    step = pl.program_id(0) * n_inner + pl.program_id(1)
    slot = step % 2

    def start_fetch(s, sl):
        start = pl.multiple_of(s * tm, 8)
        pltpu.make_async_copy(
            x_hbm.at[pl.ds(start, rows), :], buf.at[sl], sem.at[sl]
        ).start()

    # Prologue once per (per-core) inner loop: fetch this step's window.
    @pl.when(pl.program_id(1) == 0)
    def _():
        start_fetch(step, slot)

    # Wait for the current window, then prefetch the next one.
    pltpu.make_async_copy(
        x_hbm.at[pl.ds(0, rows), :], buf.at[slot], sem.at[slot]
    ).wait()

    @pl.when(pl.program_id(1) + 1 < n_inner)
    def _():
        start_fetch(step + 1, 1 - slot)

    acc = None
    for t in range(9):
        off = (t // 3) * wp + (t % 3)          # static per-tap row offset
        xt = buf[slot, pl.ds(off, tm), :]
        wt = w_ref[pl.ds(t * cin, cin), :]
        d = jnp.dot(xt, wt, preferred_element_type=jnp.float32)
        acc = d if acc is None else acc + d
    y = acc + b_ref[...]
    if apply_relu:
        y = jnp.maximum(y, 0.0)
    o_ref[...] = y.astype(o_ref.dtype)


def conv3x3_direct(x_nhwc, w_flat, bias, apply_relu=True,
                   out_dtype=jnp.bfloat16):
    """x: [N,H,W,C] bf16 (C a multiple of 128), w_flat: [9*C, Cout] bf16 with
    BN folded, bias: [Cout] f32.  Returns [N*H*W, Cout]."""
    n, h, w, c = x_nhwc.shape
    cout = w_flat.shape[1]
    hp, wp = h + 2, w + 2
    m0 = n * hp * wp                      # positions computed (incl. garbage)
    margin = _round_up(2 * wp + 2, 8)     # max tap lookahead (rows)

    tm = min(512, _round_up(m0, 8))
    n_steps = -(-m0 // tm)
    if n_steps >= 2:
        if n_steps % 2:
            n_steps += 1
        n_outer, n_inner = 2, n_steps // 2   # outer axis parallel -> v7x 2 TCs
    else:
        n_outer, n_inner = 1, n_steps
    m_pad = n_steps * tm
    rows = tm + margin

    # Single pad: 1-px spatial halo plus dummy trailing images so every DMA
    # window (and the tap lookahead of the last real rows) stays in bounds.
    n_dummy = -(-(m_pad + margin - m0) // (hp * wp))
    xp = jnp.pad(x_nhwc, ((0, n_dummy), (1, 1), (1, 1), (0, 0)))
    xflat = xp.reshape((n + n_dummy) * hp * wp, c)
    bias2d = bias.reshape(1, cout).astype(jnp.float32)

    kernel = functools.partial(
        _conv3x3_kernel, tm=tm, rows=rows, cin=c, wp=wp, apply_relu=apply_relu
    )
    out = pl.pallas_call(
        kernel,
        out_shape=jax.ShapeDtypeStruct((m_pad, cout), out_dtype),
        grid_spec=pltpu.PrefetchScalarGridSpec(
            num_scalar_prefetch=0,
            grid=(n_outer, n_inner),
            in_specs=[
                pl.BlockSpec(memory_space=pl.ANY),               # flat image (HBM)
                pl.BlockSpec((9 * c, cout), lambda o, i: (0, 0)),  # resident w
                pl.BlockSpec((1, cout), lambda o, i: (0, 0)),
            ],
            out_specs=pl.BlockSpec((tm, cout), lambda o, i: (o * n_inner + i, 0)),
            scratch_shapes=[
                pltpu.VMEM((2, rows, c), jnp.bfloat16),   # double-buffered halo
                pltpu.SemaphoreType.DMA((2,)),
            ],
        ),
        compiler_params=pltpu.CompilerParams(
            dimension_semantics=("parallel", "arbitrary"),
            vmem_limit_bytes=_VMEM_LIMIT,
        ),
    )(xflat, w_flat, bias2d)

    # Keep only valid (non-wrapped, non-padding-row) output positions.
    out = out[:m0].reshape(n, hp, wp, cout)[:, :h, :w, :]
    return out.reshape(n * h * w, cout)


# ----------------------------------------------------------------------------
# Glue (plain JAX): BN folding, channel padding, im2col fallback, layout.
# ----------------------------------------------------------------------------
def fold_bn(w, gamma, beta, mean, var):
    """Fold BN scale into the conv weights (output-channel axis is last)."""
    scale = gamma / jnp.sqrt(var + EPS)
    bias = (beta - mean * scale).astype(jnp.float32)
    w_folded = (w * scale).astype(jnp.bfloat16)
    return w_folded, bias


def _pad_dim(a, axis, target):
    if a.shape[axis] == target:
        return a
    pads = [(0, 0)] * a.ndim
    pads[axis] = (0, target - a.shape[axis])
    return jnp.pad(a, pads)


def im2col_3x3(x, stride):
    """Fallback for stride != 1.  x: [N,H,W,C] -> cols: [N*Ho*Wo, 9*C]."""
    n, h, w, c = x.shape
    xp = jnp.pad(x, ((0, 0), (1, 1), (1, 1), (0, 0)))
    ho = (h + 2 - 3) // stride + 1
    wo = (w + 2 - 3) // stride + 1
    cols = []
    for dh in range(3):
        for dw in range(3):
            patch = xp[
                :,
                dh : dh + stride * (ho - 1) + 1 : stride,
                dw : dw + stride * (wo - 1) + 1 : stride,
                :,
            ]
            cols.append(patch)
    cols = jnp.concatenate(cols, axis=-1)
    return cols.reshape(n * ho * wo, 9 * c), ho, wo


def bottleneck_forward(x_nchw, p, stride):
    """Pallas implementation of Bottleneck.forward. Input/output are NCHW f32."""
    x = jnp.transpose(x_nchw, (0, 2, 3, 1)).astype(jnp.bfloat16)  # NHWC bf16
    n, h, w, cin = x.shape
    planes = p["w1"].shape[1]
    out_ch = EXPANSION * planes
    cp = _round_up(planes, LANE)   # lane-dense intermediate channel count
    op = _round_up(out_ch, LANE)   # lane-dense block output channel count

    # stage 1: 1x1 conv + bn1 + relu (BN folded into bf16 weights, N padded)
    w1, b1 = fold_bn(p["w1"], *p["bn1"])
    out1 = fused_matmul_bn(
        x.reshape(n * h * w, cin), _pad_dim(w1, 1, cp), _pad_dim(b1, 0, cp)
    )

    # stage 2: 3x3 conv (stride, pad=1) + bn2 + relu
    w2, b2 = fold_bn(p["w2"], *p["bn2"])
    w2p = _pad_dim(_pad_dim(w2, 2, cp), 3, cp).reshape(9 * cp, cp)
    b2p = _pad_dim(b2, 0, cp)
    if stride == 1:
        out2 = conv3x3_direct(out1.reshape(n, h, w, cp), w2p, b2p)
        ho, wo = h, w
    else:
        # TODO(synk): the strided 3x3 conv still goes through a materialized
        # im2col; a phase-split (space-to-depth) direct kernel would remove it.
        cols, ho, wo = im2col_3x3(out1.reshape(n, h, w, cp), stride)
        out2 = fused_matmul_bn(cols, w2p, b2p)
    m2 = n * ho * wo

    # shortcut branch
    xs = x[:, ::stride, ::stride, :].reshape(m2, cin)
    if stride != 1 or cin != out_ch:
        ws, bs = fold_bn(p["ws"], *p["bns"])
        shortcut = fused_matmul_bn(
            xs, _pad_dim(ws, 1, op), _pad_dim(bs, 0, op), apply_relu=False
        )
    else:
        shortcut = _pad_dim(xs, 1, op)

    # stage 3: 1x1 conv + bn3 + residual add + final relu (fully fused)
    w3, b3 = fold_bn(p["w3"], *p["bn3"])
    w3p = _pad_dim(_pad_dim(w3, 0, cp), 1, op)
    out3 = fused_matmul_bn(out2, w3p, _pad_dim(b3, 0, op), residual=shortcut,
                           apply_relu=True, out_dtype=jnp.float32)

    # NOTE: when chaining blocks, stay NHWC end-to-end and skip this transpose.
    out = out3[:, :out_ch].reshape(n, ho, wo, out_ch)
    return jnp.transpose(out, (0, 3, 1, 2))  # back to NCHW


# ----------------------------------------------------------------------------
# Pure-JAX reference (lax.conv, f32) for correctness check.
# ----------------------------------------------------------------------------
def ref_forward(x_nchw, p, stride):
    dn = ("NHWC", "HWIO", "NHWC")
    x = jnp.transpose(x_nchw, (0, 2, 3, 1)).astype(jnp.float32)
    cin = x.shape[-1]
    planes = p["w1"].shape[1]
    out_ch = EXPANSION * planes

    def bn(y, params):
        g, b, m, v = params
        return (y - m) * g / jnp.sqrt(v + EPS) + b

    out = lax.conv_general_dilated(
        x, p["w1"][None, None], (1, 1), "VALID", dimension_numbers=dn
    )
    out = jax.nn.relu(bn(out, p["bn1"]))
    out = lax.conv_general_dilated(
        out, p["w2"], (stride, stride), ((1, 1), (1, 1)), dimension_numbers=dn
    )
    out = jax.nn.relu(bn(out, p["bn2"]))
    out = lax.conv_general_dilated(
        out, p["w3"][None, None], (1, 1), "VALID", dimension_numbers=dn
    )
    out = bn(out, p["bn3"])
    if stride != 1 or cin != out_ch:
        sc = lax.conv_general_dilated(
            x, p["ws"][None, None], (stride, stride), "VALID",
            dimension_numbers=dn,
        )
        sc = bn(sc, p["bns"])
    else:
        sc = x
    out = jax.nn.relu(out + sc)
    return jnp.transpose(out, (0, 3, 1, 2))


# ----------------------------------------------------------------------------
# Deterministic parameter construction (synthetic, fan-in-scaled init).
# ----------------------------------------------------------------------------
def make_params(key, in_planes, planes):
    out_ch = EXPANSION * planes
    ks = jax.random.split(key, 8)

    def bn_params(k, c):
        k1, k2, k3, k4 = jax.random.split(k, 4)
        gamma = jax.random.uniform(k1, (c,), jnp.float32, 0.5, 1.5)
        beta = 0.1 * jax.random.normal(k2, (c,), jnp.float32)
        mean = 0.1 * jax.random.normal(k3, (c,), jnp.float32)
        var = jax.random.uniform(k4, (c,), jnp.float32, 0.5, 1.5)
        return (gamma, beta, mean, var)

    def conv_w(k, shape, fan_in):
        return jax.random.normal(k, shape, jnp.float32) * (2.0 / fan_in) ** 0.5

    return {
        "w1": conv_w(ks[0], (in_planes, planes), in_planes),
        "w2": conv_w(ks[1], (3, 3, planes, planes), 9 * planes),
        "w3": conv_w(ks[2], (planes, out_ch), planes),
        "ws": conv_w(ks[3], (in_planes, out_ch), in_planes),
        "bn1": bn_params(ks[4], planes),
        "bn2": bn_params(ks[5], planes),
        "bn3": bn_params(ks[6], out_ch),
        "bns": bn_params(ks[7], out_ch),
    }


if __name__ == "__main__":
    key = jax.random.PRNGKey(0)
    fwd = jax.jit(bottleneck_forward, static_argnums=2)

    configs = [
        # (batch, in_planes, planes, spatial, stride)
        (2, 4, 4, 16, 2),      # projection shortcut, strided (im2col fallback)
        (2, 16, 4, 8, 1),      # identity shortcut, direct 3x3 conv kernel
        (1, 512, 512, 4, 1),   # wide channels: full-K path + N tiling
    ]

    for idx, (n, cin, planes, hw, stride) in enumerate(configs):
        kx, kp, key = jax.random.split(key, 3)
        x = jax.random.normal(kx, (n, cin, hw, hw), jnp.float32)  # NCHW
        params = make_params(kp, cin, planes)

        out = jax.block_until_ready(fwd(x, params, stride))
        ref = jax.block_until_ready(ref_forward(x, params, stride))

        ho = (hw + 2 - 3) // stride + 1
        assert out.shape == (n, EXPANSION * planes, ho, ho), (idx, out.shape)
        # bf16 inputs/weights with f32 accumulation: scale-relative max error.
        err = float(
            jnp.max(jnp.abs(out - ref)) / (jnp.max(jnp.abs(ref)) + 1e-6)
        )
        assert err < 2e-2, (idx, err)

    print("KERNEL_OK")
</pallas_src>

<mosaic_0001>
module attributes {stable_mosaic.version = 11 : i64} {
  func.func @_mm_epilogue_kernel(%arg0: i32, %arg1: i32, %arg2: memref<512x4xbf16, #tpu.memory_space<vmem>>, %arg3: memref<4x128xbf16, #tpu.memory_space<vmem>>, %arg4: memref<1x128xf32, #tpu.memory_space<vmem>>, %arg5: memref<512x128xbf16, #tpu.memory_space<vmem>>) attributes {dimension_semantics = [#tpu.dimension_semantics<parallel>, #tpu.dimension_semantics<parallel>], iteration_bounds = array<i64: 1, 1>, scalar_prefetch = 0 : i64, scratch_operands = 0 : i64, tpu.core_type = #tpu.core_type<tc>, window_params = [{transform_indices = @transform_0, window_bounds = array<i64: 512, 4>}, {transform_indices = @transform_1, window_bounds = array<i64: 4, 128>}, {transform_indices = @transform_2, window_bounds = array<i64: 1, 128>}, {transform_indices = @transform_3, window_bounds = array<i64: 512, 128>}]} {
    %c0 = arith.constant 0 : index
    %c0_0 = arith.constant 0 : index
    %0 = vector.load %arg2[%c0, %c0_0] : memref<512x4xbf16, #tpu.memory_space<vmem>>, vector<512x4xbf16>
    %c0_1 = arith.constant 0 : index
    %c0_2 = arith.constant 0 : index
    %1 = vector.load %arg3[%c0_1, %c0_2] : memref<4x128xbf16, #tpu.memory_space<vmem>>, vector<4x128xbf16>
    %cst = arith.constant dense<0.000000e+00> : vector<512x128xf32>
    %2 = tpu.matmul %0, %1, %cst {dimension_numbers = #tpu.dot_dimension_numbers<[1], [0], [0], [1], [0, 0, 1, 1], [], []>} : vector<512x4xbf16>, vector<4x128xbf16>, vector<512x128xf32> -> vector<512x128xf32>
    %c0_3 = arith.constant 0 : index
    %c0_4 = arith.constant 0 : index
    %3 = vector.load %arg4[%c0_3, %c0_4] : memref<1x128xf32, #tpu.memory_space<vmem>>, vector<1x128xf32>
    %4 = vector.broadcast %3 : vector<1x128xf32> to vector<512x128xf32>
    %5 = arith.addf %2, %4 : vector<512x128xf32>
    %cst_5 = arith.constant 0.000000e+00 : f32
    %6 = vector.broadcast %cst_5 : f32 to vector<512x128xf32>
    %7 = arith.maximumf %5, %6 : vector<512x128xf32>
    %8 = arith.truncf %7 : vector<512x128xf32> to vector<512x128xbf16>
    %c0_6 = arith.constant 0 : index
    %c0_7 = arith.constant 0 : index
    %9 = vector.load %arg5[%c0_6, %c0_7] : memref<512x128xbf16, #tpu.memory_space<vmem>>, vector<512x128xbf16>
    tpu.vector_store %arg5[%c0_6, %c0_7], %8 {strides = array<i32>} : memref<512x128xbf16, #tpu.memory_space<vmem>>, vector<512x128xbf16>,
    return
  }
  func.func @transform_0(%arg0: i32, %arg1: i32) -> (i32, i32) {
    %c0_i32 = arith.constant 0 : i32
    %c0_i32_0 = arith.constant 0 : i32
    return %arg0, %c0_i32 : i32, i32
  }
  func.func @transform_1(%arg0: i32, %arg1: i32) -> (i32, i32) {
    %c0_i32 = arith.constant 0 : i32
    %c0_i32_0 = arith.constant 0 : i32
    return %c0_i32, %arg1 : i32, i32
  }
  func.func @transform_2(%arg0: i32, %arg1: i32) -> (i32, i32) {
    %c0_i32 = arith.constant 0 : i32
    %c0_i32_0 = arith.constant 0 : i32
    return %c0_i32, %arg1 : i32, i32
  }
  func.func @transform_3(%arg0: i32, %arg1: i32) -> (i32, i32) {
    %c0_i32 = arith.constant 0 : i32
    return %arg0, %arg1 : i32, i32
  }
}

module attributes {stable_mosaic.version = 11 : i64} {
  func.func @_mm_epilogue_acc_kernel(%arg0: i32, %arg1: i32, %arg2: i32, %arg3: memref<128x384xbf16, #tpu.memory_space<vmem>>, %arg4: memref<384x128xbf16, #tpu.memory_space<vmem>>, %arg5: memref<1x128xf32, #tpu.memory_space<vmem>>, %arg6: memref<128x128xbf16, #tpu.memory_space<vmem>>, %arg7: memref<128x128xf32, #tpu.memory_space<vmem>>) attributes {dimension_semantics = [#tpu.dimension_semantics<parallel>, #tpu.dimension_semantics<parallel>, #tpu.dimension_semantics<arbitrary>], iteration_bounds = array<i64: 1, 1, 3>, scalar_prefetch = 0 : i64, scratch_operands = 1 : i64, tpu.core_type = #tpu.core_type<tc>, window_params = [{transform_indices = @transform_0, window_bounds = array<i64: 128, 384>}, {transform_indices = @transform_1, window_bounds = array<i64: 384, 128>}, {transform_indices = @transform_2, window_bounds = array<i64: 1, 128>}, {transform_indices = @transform_3, window_bounds = array<i64: 128, 128>}]} {
    %c0_i32 = arith.constant 0 : i32
    %0 = arith.cmpi eq, %arg2, %c0_i32 : i32
    %1 = arith.extui %0 : i1 to i32
    %c0_i32_0 = arith.constant 0 : i32
    %2 = arith.cmpi ne, %1, %c0_i32_0 : i32
    scf.if %2 {
      %cst_9 = arith.constant 0.000000e+00 : f32
      %12 = vector.broadcast %cst_9 : f32 to vector<128x128xf32>
      %c0_10 = arith.constant 0 : index
      %c0_11 = arith.constant 0 : index
      %13 = vector.load %arg7[%c0_10, %c0_11] : memref<128x128xf32, #tpu.memory_space<vmem>>, vector<128x128xf32>
      tpu.vector_store %arg7[%c0_10, %c0_11], %12 {strides = array<i32>} : memref<128x128xf32, #tpu.memory_space<vmem>>, vector<128x128xf32>,
    } else {
    }
    %c0 = arith.constant 0 : index
    %c0_1 = arith.constant 0 : index
    %3 = vector.load %arg7[%c0, %c0_1] : memref<128x128xf32, #tpu.memory_space<vmem>>, vector<128x128xf32>
    %c0_2 = arith.constant 0 : index
    %c0_3 = arith.constant 0 : index
    %4 = vector.load %arg3[%c0_2, %c0_3] : memref<128x384xbf16, #tpu.memory_space<vmem>>, vector<128x384xbf16>
    %c0_4 = arith.constant 0 : index
    %c0_5 = arith.constant 0 : index
    %5 = vector.load %arg4[%c0_4, %c0_5] : memref<384x128xbf16, #tpu.memory_space<vmem>>, vector<384x128xbf16>
    %cst = arith.constant dense<0.000000e+00> : vector<128x128xf32>
    %6 = tpu.matmul %4, %5, %cst {dimension_numbers = #tpu.dot_dimension_numbers<[1], [0], [0], [1], [0, 0, 1, 1], [], []>} : vector<128x384xbf16>, vector<384x128xbf16>, vector<128x128xf32> -> vector<128x128xf32>
    %7 = arith.addf %3, %6 : vector<128x128xf32>
    %c0_6 = arith.constant 0 : index
    %c0_7 = arith.constant 0 : index
    %8 = vector.load %arg7[%c0_6, %c0_7] : memref<128x128xf32, #tpu.memory_space<vmem>>, vector<128x128xf32>
    tpu.vector_store %arg7[%c0_6, %c0_7], %7 {strides = array<i32>} : memref<128x128xf32, #tpu.memory_space<vmem>>, vector<128x128xf32>,
    %c2_i32 = arith.constant 2 : i32
    %9 = arith.cmpi eq, %arg2, %c2_i32 : i32
    %10 = arith.extui %9 : i1 to i32
    %c0_i32_8 = arith.constant 0 : i32
    %11 = arith.cmpi ne, %10, %c0_i32_8 : i32
    scf.if %11 {
      %c0_9 = arith.constant 0 : index
      %c0_10 = arith.constant 0 : index
      %12 = vector.load %arg7[%c0_9, %c0_10] : memref<128x128xf32, #tpu.memory_space<vmem>>, vector<128x128xf32>
      %c0_11 = arith.constant 0 : index
      %c0_12 = arith.constant 0 : index
      %13 = vector.load %arg5[%c0_11, %c0_12] : memref<1x128xf32, #tpu.memory_space<vmem>>, vector<1x128xf32>
      %14 = vector.broadcast %13 : vector<1x128xf32> to vector<128x128xf32>
      %15 = arith.addf %12, %14 : vector<128x128xf32>
      %cst_13 = arith.constant 0.000000e+00 : f32
      %16 = vector.broadcast %cst_13 : f32 to vector<128x128xf32>
      %17 = arith.maximumf %15, %16 : vector<128x128xf32>
      %18 = arith.truncf %17 : vector<128x128xf32> to vector<128x128xbf16>
      %c0_14 = arith.constant 0 : index
      %c0_15 = arith.constant 0 : index
      %19 = vector.load %arg6[%c0_14, %c0_15] : memref<128x128xbf16, #tpu.memory_space<vmem>>, vector<128x128xbf16>
      tpu.vector_store %arg6[%c0_14, %c0_15], %18 {strides = array<i32>} : memref<128x128xbf16, #tpu.memory_space<vmem>>, vector<128x128xbf16>,
    } else {
    }
    return
  }
  func.func @transform_0(%arg0: i32, %arg1: i32, %arg2: i32) -> (i32, i32) {
    %c0_i32 = arith.constant 0 : i32
    return %arg0, %arg2 : i32, i32
  }
  func.func @transform_1(%arg0: i32, %arg1: i32, %arg2: i32) -> (i32, i32) {
    %c0_i32 = arith.constant 0 : i32
    return %arg2, %arg1 : i32, i32
  }
  func.func @transform_2(%arg0: i32, %arg1: i32, %arg2: i32) -> (i32, i32) {
    %c0_i32 = arith.constant 0 : i32
    %c0_i32_0 = arith.constant 0 : i32
    return %c0_i32, %arg1 : i32, i32
  }
  func.func @transform_3(%arg0: i32, %arg1: i32, %arg2: i32) -> (i32, i32) {
    %c0_i32 = arith.constant 0 : i32
    return %arg0, %arg1 : i32, i32
  }
}

module attributes {stable_mosaic.version = 11 : i64} {
  func.func @_mm_epilogue_kernel(%arg0: i32, %arg1: i32, %arg2: memref<128x4xbf16, #tpu.memory_space<vmem>>, %arg3: memref<4x128xbf16, #tpu.memory_space<vmem>>, %arg4: memref<1x128xf32, #tpu.memory_space<vmem>>, %arg5: memref<128x128xbf16, #tpu.memory_space<vmem>>) attributes {dimension_semantics = [#tpu.dimension_semantics<parallel>, #tpu.dimension_semantics<parallel>], iteration_bounds = array<i64: 1, 1>, scalar_prefetch = 0 : i64, scratch_operands = 0 : i64, tpu.core_type = #tpu.core_type<tc>, window_params = [{transform_indices = @transform_0, window_bounds = array<i64: 128, 4>}, {transform_indices = @transform_1, window_bounds = array<i64: 4, 128>}, {transform_indices = @transform_2, window_bounds = array<i64: 1, 128>}, {transform_indices = @transform_3, window_bounds = array<i64: 128, 128>}]} {
    %c0 = arith.constant 0 : index
    %c0_0 = arith.constant 0 : index
    %0 = vector.load %arg2[%c0, %c0_0] : memref<128x4xbf16, #tpu.memory_space<vmem>>, vector<128x4xbf16>
    %c0_1 = arith.constant 0 : index
    %c0_2 = arith.constant 0 : index
    %1 = vector.load %arg3[%c0_1, %c0_2] : memref<4x128xbf16, #tpu.memory_space<vmem>>, vector<4x128xbf16>
    %cst = arith.constant dense<0.000000e+00> : vector<128x128xf32>
    %2 = tpu.matmul %0, %1, %cst {dimension_numbers = #tpu.dot_dimension_numbers<[1], [0], [0], [1], [0, 0, 1, 1], [], []>} : vector<128x4xbf16>, vector<4x128xbf16>, vector<128x128xf32> -> vector<128x128xf32>
    %c0_3 = arith.constant 0 : index
    %c0_4 = arith.constant 0 : index
    %3 = vector.load %arg4[%c0_3, %c0_4] : memref<1x128xf32, #tpu.memory_space<vmem>>, vector<1x128xf32>
    %4 = vector.broadcast %3 : vector<1x128xf32> to vector<128x128xf32>
    %5 = arith.addf %2, %4 : vector<128x128xf32>
    %6 = arith.truncf %5 : vector<128x128xf32> to vector<128x128xbf16>
    %c0_5 = arith.constant 0 : index
    %c0_6 = arith.constant 0 : index
    %7 = vector.load %arg5[%c0_5, %c0_6] : memref<128x128xbf16, #tpu.memory_space<vmem>>, vector<128x128xbf16>
    tpu.vector_store %arg5[%c0_5, %c0_6], %6 {strides = array<i32>} : memref<128x128xbf16, #tpu.memory_space<vmem>>, vector<128x128xbf16>,
    return
  }
  func.func @transform_0(%arg0: i32, %arg1: i32) -> (i32, i32) {
    %c0_i32 = arith.constant 0 : i32
    %c0_i32_0 = arith.constant 0 : i32
    return %arg0, %c0_i32 : i32, i32
  }
  func.func @transform_1(%arg0: i32, %arg1: i32) -> (i32, i32) {
    %c0_i32 = arith.constant 0 : i32
    %c0_i32_0 = arith.constant 0 : i32
    return %c0_i32, %arg1 : i32, i32
  }
  func.func @transform_2(%arg0: i32, %arg1: i32) -> (i32, i32) {
    %c0_i32 = arith.constant 0 : i32
    %c0_i32_0 = arith.constant 0 : i32
    return %c0_i32, %arg1 : i32, i32
  }
  func.func @transform_3(%arg0: i32, %arg1: i32) -> (i32, i32) {
    %c0_i32 = arith.constant 0 : i32
    return %arg0, %arg1 : i32, i32
  }
}

module attributes {stable_mosaic.version = 11 : i64} {
  func.func @_mm_epilogue_kernel(%arg0: i32, %arg1: i32, %arg2: memref<128x128xbf16, #tpu.memory_space<vmem>>, %arg3: memref<128x128xbf16, #tpu.memory_space<vmem>>, %arg4: memref<1x128xf32, #tpu.memory_space<vmem>>, %arg5: memref<128x128xbf16, #tpu.memory_space<vmem>>, %arg6: memref<128x128xf32, #tpu.memory_space<vmem>>) attributes {dimension_semantics = [#tpu.dimension_semantics<parallel>, #tpu.dimension_semantics<parallel>], iteration_bounds = array<i64: 1, 1>, scalar_prefetch = 0 : i64, scratch_operands = 0 : i64, tpu.core_type = #tpu.core_type<tc>, window_params = [{transform_indices = @transform_0, window_bounds = array<i64: 128, 128>}, {transform_indices = @transform_1, window_bounds = array<i64: 128, 128>}, {transform_indices = @transform_2, window_bounds = array<i64: 1, 128>}, {transform_indices = @transform_3, window_bounds = array<i64: 128, 128>}, {transform_indices = @transform_4, window_bounds = array<i64: 128, 128>}]} {
    %c0 = arith.constant 0 : index
    %c0_0 = arith.constant 0 : index
    %0 = vector.load %arg2[%c0, %c0_0] : memref<128x128xbf16, #tpu.memory_space<vmem>>, vector<128x128xbf16>
    %c0_1 = arith.constant 0 : index
    %c0_2 = arith.constant 0 : index
    %1 = vector.load %arg3[%c0_1, %c0_2] : memref<128x128xbf16, #tpu.memory_space<vmem>>, vector<128x128xbf16>
    %cst = arith.constant dense<0.000000e+00> : vector<128x128xf32>
    %2 = tpu.matmul %0, %1, %cst {dimension_numbers = #tpu.dot_dimension_numbers<[1], [0], [0], [1], [0, 0, 1, 1], [], []>} : vector<128x128xbf16>, vector<128x128xbf16>, vector<128x128xf32> -> vector<128x128xf32>
    %c0_3 = arith.constant 0 : index
    %c0_4 = arith.constant 0 : index
    %3 = vector.load %arg4[%c0_3, %c0_4] : memref<1x128xf32, #tpu.memory_space<vmem>>, vector<1x128xf32>
    %4 = vector.broadcast %3 : vector<1x128xf32> to vector<128x128xf32>
    %5 = arith.addf %2, %4 : vector<128x128xf32>
    %c0_5 = arith.constant 0 : index
    %c0_6 = arith.constant 0 : index
    %6 = vector.load %arg5[%c0_5, %c0_6] : memref<128x128xbf16, #tpu.memory_space<vmem>>, vector<128x128xbf16>
    %7 = arith.extf %6 : vector<128x128xbf16> to vector<128x128xf32>
    %8 = arith.addf %5, %7 : vector<128x128xf32>
    %cst_7 = arith.constant 0.000000e+00 : f32
    %9 = vector.broadcast %cst_7 : f32 to vector<128x128xf32>
    %10 = arith.maximumf %8, %9 : vector<128x128xf32>
    %c0_8 = arith.constant 0 : index
    %c0_9 = arith.constant 0 : index
    %11 = vector.load %arg6[%c0_8, %c0_9] : memref<128x128xf32, #tpu.memory_space<vmem>>, vector<128x128xf32>
    tpu.vector_store %arg6[%c0_8, %c0_9], %10 {strides = array<i32>} : memref<128x128xf32, #tpu.memory_space<vmem>>, vector<128x128xf32>,
    return
  }
  func.func @transform_0(%arg0: i32, %arg1: i32) -> (i32, i32) {
    %c0_i32 = arith.constant 0 : i32
    %c0_i32_0 = arith.constant 0 : i32
    return %arg0, %c0_i32 : i32, i32
  }
  func.func @transform_1(%arg0: i32, %arg1: i32) -> (i32, i32) {
    %c0_i32 = arith.constant 0 : i32
    %c0_i32_0 = arith.constant 0 : i32
    return %c0_i32, %arg1 : i32, i32
  }
  func.func @transform_2(%arg0: i32, %arg1: i32) -> (i32, i32) {
    %c0_i32 = arith.constant 0 : i32
    %c0_i32_0 = arith.constant 0 : i32
    return %c0_i32, %arg1 : i32, i32
  }
  func.func @transform_3(%arg0: i32, %arg1: i32) -> (i32, i32) {
    %c0_i32 = arith.constant 0 : i32
    return %arg0, %arg1 : i32, i32
  }
  func.func @transform_4(%arg0: i32, %arg1: i32) -> (i32, i32) {
    %c0_i32 = arith.constant 0 : i32
    return %arg0, %arg1 : i32, i32
  }
}

</mosaic_0001>

<llo_original>
// kernel: bottleneck_forward.4
$region0: #{bottleneck_forward.4}
  #allocation0 [shape = 'u32[]', space=smem, size = 0x4, offset = 0x4, fixed_abs, tag = 'smem constant byte address 0x4 - core index']
  #allocation1 [shape = 'u32[144,128]{1,0:T(1,128)}', space=vmem, size = 0x12000, scoped, tag = 'internal scratch']
  %s0 = inlined_call_operand.vmem [shape: bf16[512,4], index: 0, kind: input, shape index: {}]
  %s1 = inlined_call_operand.vmem [shape: bf16[4,128], index: 1, kind: input, shape index: {}]
  %s2 = inlined_call_operand.vmem [shape: f32[1,128], index: 2, kind: input, shape index: {}]
  %s3 = inlined_call_operand.vmem [shape: bf16[512,128], index: 3, kind: output, shape index: {}]
  %s4 = sld [smem:[#allocation0]]
  $region22: #{bottleneck_forward.4} parent=0
    _
  %s6 = ssub.s32 1, %s4
  %s7 = scalar_select 0, %s6, %s4
  // Predicated region
  $region2: #{bottleneck_forward.4} parent=0 // pred_check
    _
  $region3: #{bottleneck_forward.4} parent=0 // pred_check_branch
    %9 = sbr.rel (0) target = $region5
  $region4: #{bottleneck_forward.4} parent=0 // pred_region
    _
  $region5: #{bottleneck_forward.4} parent=0 // pred_fallthru
    _
  // Predicated region
  $region6: #{bottleneck_forward.4} parent=0 // pred_check
    _
  $region7: #{bottleneck_forward.4} parent=0 // pred_check_branch
    %11 = sbr.rel (0) target = $region9
  $region8: #{bottleneck_forward.4} parent=0 // pred_region
    _
  $region9: #{bottleneck_forward.4} parent=0 // pred_fallthru
    _
  // Predicated region
  $region10: #{bottleneck_forward.4} parent=0 // pred_check
    _
  $region11: #{bottleneck_forward.4} parent=0 // pred_check_branch
    %13 = sbr.rel (0) target = $region13
  $region12: #{bottleneck_forward.4} parent=0 // pred_region
    _
  $region13: #{bottleneck_forward.4} parent=0 // pred_fallthru
    _
  %v15 = vld [vmem:[%s0] sm:$0xf]
  %v16 = vld [vmem:[%s0 + $0x4] sm:$0xf]
  %v17 = vld [vmem:[%s0 + $0x8] sm:$0xf]
  %v18 = vld [vmem:[%s0 + $0xc] sm:$0xf]
  %v19 = vld [vmem:[%s0 + $0x10] sm:$0xf]
  %v20 = vld [vmem:[%s0 + $0x14] sm:$0xf]
  %v21 = vld [vmem:[%s0 + $0x18] sm:$0xf]
  %v22 = vld [vmem:[%s0 + $0x1c] sm:$0xf]
  %v23 = vld [vmem:[%s0 + $0x20] sm:$0xf]
  %v24 = vld [vmem:[%s0 + $0x24] sm:$0xf]
  %v25 = vld [vmem:[%s0 + $0x28] sm:$0xf]
  %v26 = vld [vmem:[%s0 + $0x2c] sm:$0xf]
  %v27 = vld [vmem:[%s0 + $0x30] sm:$0xf]
  %v28 = vld [vmem:[%s0 + $0x34] sm:$0xf]
  %v29 = vld [vmem:[%s0 + $0x38] sm:$0xf]
  %v30 = vld [vmem:[%s0 + $0x3c] sm:$0xf]
  %v31 = vld [vmem:[%s0 + $0x40] sm:$0xf]
  %v32 = vld [vmem:[%s0 + $0x44] sm:$0xf]
  %v33 = vld [vmem:[%s0 + $0x48] sm:$0xf]
  %v34 = vld [vmem:[%s0 + $0x4c] sm:$0xf]
  %v35 = vld [vmem:[%s0 + $0x50] sm:$0xf]
  %v36 = vld [vmem:[%s0 + $0x54] sm:$0xf]
  %v37 = vld [vmem:[%s0 + $0x58] sm:$0xf]
  %v38 = vld [vmem:[%s0 + $0x5c] sm:$0xf]
  %v39 = vld [vmem:[%s0 + $0x60] sm:$0xf]
  %v40 = vld [vmem:[%s0 + $0x64] sm:$0xf]
  %v41 = vld [vmem:[%s0 + $0x68] sm:$0xf]
  %v42 = vld [vmem:[%s0 + $0x6c] sm:$0xf]
  %v43 = vld [vmem:[%s0 + $0x70] sm:$0xf]
  %v44 = vld [vmem:[%s0 + $0x74] sm:$0xf]
  %v45 = vld [vmem:[%s0 + $0x78] sm:$0xf]
  %v46 = vld [vmem:[%s0 + $0x7c] sm:$0xf]
  %v47 = vld [vmem:[%s0 + $0x80] sm:$0xf]
  %v48 = vld [vmem:[%s0 + $0x84] sm:$0xf]
  %v49 = vld [vmem:[%s0 + $0x88] sm:$0xf]
  %v50 = vld [vmem:[%s0 + $0x8c] sm:$0xf]
  %v51 = vld [vmem:[%s0 + $0x90] sm:$0xf]
  %v52 = vld [vmem:[%s0 + $0x94] sm:$0xf]
  %v53 = vld [vmem:[%s0 + $0x98] sm:$0xf]
  %v54 = vld [vmem:[%s0 + $0x9c] sm:$0xf]
  %v55 = vld [vmem:[%s0 + $0xa0] sm:$0xf]
  %v56 = vld [vmem:[%s0 + $0xa4] sm:$0xf]
  %v57 = vld [vmem:[%s0 + $0xa8] sm:$0xf]
  %v58 = vld [vmem:[%s0 + $0xac] sm:$0xf]
  %v59 = vld [vmem:[%s0 + $0xb0] sm:$0xf]
  %v60 = vld [vmem:[%s0 + $0xb4] sm:$0xf]
  %v61 = vld [vmem:[%s0 + $0xb8] sm:$0xf]
  %v62 = vld [vmem:[%s0 + $0xbc] sm:$0xf]
  %v63 = vld [vmem:[%s0 + $0xc0] sm:$0xf]
  %v64 = vld [vmem:[%s0 + $0xc4] sm:$0xf]
  %v65 = vld [vmem:[%s0 + $0xc8] sm:$0xf]
  %v66 = vld [vmem:[%s0 + $0xcc] sm:$0xf]
  %v67 = vld [vmem:[%s0 + $0xd0] sm:$0xf]
  %v68 = vld [vmem:[%s0 + $0xd4] sm:$0xf]
  %v69 = vld [vmem:[%s0 + $0xd8] sm:$0xf]
  %v70 = vld [vmem:[%s0 + $0xdc] sm:$0xf]
  %v71 = vld [vmem:[%s0 + $0xe0] sm:$0xf]
  %v72 = vld [vmem:[%s0 + $0xe4] sm:$0xf]
  %v73 = vld [vmem:[%s0 + $0xe8] sm:$0xf]
  %v74 = vld [vmem:[%s0 + $0xec] sm:$0xf]
  %v75 = vld [vmem:[%s0 + $0xf0] sm:$0xf]
  %v76 = vld [vmem:[%s0 + $0xf4] sm:$0xf]
  %v77 = vld [vmem:[%s0 + $0xf8] sm:$0xf]
  %v78 = vld [vmem:[%s0 + $0xfc] sm:$0xf]
  %v79 = vld [vmem:[%s1] sm:$0x3]
  %v80 = vld [vmem:[%s2] sm:$0x1]
  %v82 = vlaneseq
  %v83 = vshrl.u32 %v82, 7
  %v84 = vsub.s32 0, %v83
  %v85 = vrot.slane %v80, %v84
  %v151 = vunpack.c.l.b16 %v15
  %v152 = vunpack.c.l.b16 %v16
  %v153 = vunpack.c.l.b16 %v17
  %v154 = vunpack.c.l.b16 %v18
  %v155 = vunpack.c.l.b16 %v19
  %v156 = vunpack.c.l.b16 %v20
  %v157 = vunpack.c.l.b16 %v21
  %v158 = vunpack.c.l.b16 %v22
  %v159 = vunpack.c.l.b16 %v23
  %v160 = vunpack.c.l.b16 %v24
  %v161 = vunpack.c.l.b16 %v25
  %v162 = vunpack.c.l.b16 %v26
  %v163 = vunpack.c.l.b16 %v27
  %v164 = vunpack.c.l.b16 %v28
  %v165 = vunpack.c.l.b16 %v29
  %v166 = vunpack.c.l.b16 %v30
  %v167 = vunpack.c.l.b16 %v31
  %v168 = vunpack.c.l.b16 %v32
  %v169 = vunpack.c.l.b16 %v33
  %v170 = vunpack.c.l.b16 %v34
  %v171 = vunpack.c.l.b16 %v35
  %v172 = vunpack.c.l.b16 %v36
  %v173 = vunpack.c.l.b16 %v37
  %v174 = vunpack.c.l.b16 %v38
  %v175 = vunpack.c.l.b16 %v39
  %v176 = vunpack.c.l.b16 %v40
  %v177 = vunpack.c.l.b16 %v41
  %v178 = vunpack.c.l.b16 %v42
  %v179 = vunpack.c.l.b16 %v43
  %v180 = vunpack.c.l.b16 %v44
  %v181 = vunpack.c.l.b16 %v45
  %v182 = vunpack.c.l.b16 %v46
  %v183 = vunpack.c.l.b16 %v47
  %v184 = vunpack.c.l.b16 %v48
  %v185 = vunpack.c.l.b16 %v49
  %v186 = vunpack.c.l.b16 %v50
  %v187 = vunpack.c.l.b16 %v51
  %v188 = vunpack.c.l.b16 %v52
  %v189 = vunpack.c.l.b16 %v53
  %v190 = vunpack.c.l.b16 %v54
  %v191 = vunpack.c.l.b16 %v55
  %v192 = vunpack.c.l.b16 %v56
  %v193 = vunpack.c.l.b16 %v57
  %v194 = vunpack.c.l.b16 %v58
  %v195 = vunpack.c.l.b16 %v59
  %v196 = vunpack.c.l.b16 %v60
  %v197 = vunpack.c.l.b16 %v61
  %v198 = vunpack.c.l.b16 %v62
  %v199 = vunpack.c.l.b16 %v63
  %v200 = vunpack.c.l.b16 %v64
  %v201 = vunpack.c.l.b16 %v65
  %v202 = vunpack.c.l.b16 %v66
  %v203 = vunpack.c.l.b16 %v67
  %v204 = vunpack.c.l.b16 %v68
  %v205 = vunpack.c.l.b16 %v69
  %v206 = vunpack.c.l.b16 %v70
  %v207 = vunpack.c.l.b16 %v71
  %v208 = vunpack.c.l.b16 %v72
  %v209 = vunpack.c.l.b16 %v73
  %v210 = vunpack.c.l.b16 %v74
  %v211 = vunpack.c.l.b16 %v75
  %v212 = vunpack.c.l.b16 %v76
  %v213 = vunpack.c.l.b16 %v77
  %v214 = vunpack.c.l.b16 %v78
  %v215 = vpack.c.b16 %v152, %v151
  %v216 = vpack.c.b16 %v154, %v153
  %v217 = vpack.c.b16 %v156, %v155
  %v218 = vpack.c.b16 %v158, %v157
  %v219 = vpack.c.b16 %v160, %v159
  %v220 = vpack.c.b16 %v162, %v161
  %v221 = vpack.c.b16 %v164, %v163
  %v222 = vpack.c.b16 %v166, %v165
  %v223 = vpack.c.b16 %v168, %v167
  %v224 = vpack.c.b16 %v170, %v169
  %v225 = vpack.c.b16 %v172, %v171
  %v226 = vpack.c.b16 %v174, %v173
  %v227 = vpack.c.b16 %v176, %v175
  %v228 = vpack.c.b16 %v178, %v177
  %v229 = vpack.c.b16 %v180, %v179
  %v230 = vpack.c.b16 %v182, %v181
  %v231 = vpack.c.b16 %v184, %v183
  %v232 = vpack.c.b16 %v186, %v185
  %v233 = vpack.c.b16 %v188, %v187
  %v234 = vpack.c.b16 %v190, %v189
  %v235 = vpack.c.b16 %v192, %v191
  %v236 = vpack.c.b16 %v194, %v193
  %v237 = vpack.c.b16 %v196, %v195
  %v238 = vpack.c.b16 %v198, %v197
  %v239 = vpack.c.b16 %v200, %v199
  %v240 = vpack.c.b16 %v202, %v201
  %v241 = vpack.c.b16 %v204, %v203
  %v242 = vpack.c.b16 %v206, %v205
  %v243 = vpack.c.b16 %v208, %v207
  %v244 = vpack.c.b16 %v210, %v209
  %v245 = vpack.c.b16 %v212, %v211
  %v246 = vpack.c.b16 %v214, %v213
  %vm247 = vcmask 31744
  %v249 = vsel %vm247, %v215, 0
  %v252 = vsel %vm247, %v216, 0
  %v255 = vsel %vm247, %v217, 0
  %v258 = vsel %vm247, %v218, 0
  %v261 = vsel %vm247, %v219, 0
  %v264 = vsel %vm247, %v220, 0
  %v267 = vsel %vm247, %v221, 0
  %v270 = vsel %vm247, %v222, 0
  %v273 = vsel %vm247, %v223, 0
  %v276 = vsel %vm247, %v224, 0
  %v279 = vsel %vm247, %v225, 0
  %v282 = vsel %vm247, %v226, 0
  %v285 = vsel %vm247, %v227, 0
  %v288 = vsel %vm247, %v228, 0
  %v291 = vsel %vm247, %v229, 0
  %v294 = vsel %vm247, %v230, 0
  %v297 = vsel %vm247, %v231, 0
  %v300 = vsel %vm247, %v232, 0
  %v303 = vsel %vm247, %v233, 0
  %v306 = vsel %vm247, %v234, 0
  %v309 = vsel %vm247, %v235, 0
  %v312 = vsel %vm247, %v236, 0
  %v315 = vsel %vm247, %v237, 0
  %v318 = vsel %vm247, %v238, 0
  %v321 = vsel %vm247, %v239, 0
  %v324 = vsel %vm247, %v240, 0
  %v327 = vsel %vm247, %v241, 0
  %v330 = vsel %vm247, %v242, 0
  %v333 = vsel %vm247, %v243, 0
  %v336 = vsel %vm247, %v244, 0
  %v339 = vsel %vm247, %v245, 0
  %v342 = vsel %vm247, %v246, 0
  %vm344 = vcmask 1041408
  %v346 = vsel %vm344, %v79, 0
  %348 = vmatprep.subr.bf16.mxu0 0
  %349 = vmatpush1.bf16.msra.mxu0 0
  %350 = vmatprep.subr.bf16.mxu0 0
  %351 = vmatpush1.bf16.msra.mxu0 0
  %352 = vmatprep.subr.bf16.mxu0 0
  %353 = vmatpush1.bf16.msra.mxu0 0
  %354 = vmatprep.subr.bf16.mxu0 0
  %355 = vmatpush1.bf16.msra.mxu0 0
  %356 = vmatprep.subr.bf16.mxu0 0
  %357 = vmatpush1.bf16.msra.mxu0 0
  %358 = vmatprep.subr.bf16.mxu0 0
  %359 = vmatpush1.bf16.msra.mxu0 0
  %360 = vmatprep.subr.bf16.mxu0 0
  %361 = vmatpush1.bf16.msra.mxu0 0
  %362 = vmatprep.subr.bf16.mxu0 0
  %363 = vmatpush1.bf16.msra.mxu0 %v346
  %364 = vmatprep.subr.bf16.mxu0 0
  %365 = vmatpush2.bf16.msra.mxu0 0
  %366 = vmatprep.subr.bf16.mxu0 0
  %367 = vmatpush2.bf16.msra.mxu0 0
  %368 = vmatprep.subr.bf16.mxu0 0
  %369 = vmatpush2.bf16.msra.mxu0 0
  %370 = vmatprep.subr.bf16.mxu0 0
  %371 = vmatpush2.bf16.msra.mxu0 0
  %372 = vmatprep.subr.bf16.mxu0 0
  %373 = vmatpush2.bf16.msra.mxu0 0
  %374 = vmatprep.subr.bf16.mxu0 0
  %375 = vmatpush2.bf16.msra.mxu0 0
  %376 = vmatprep.subr.bf16.mxu0 0
  %377 = vmatpush2.bf16.msra.mxu0 0
  %378 = vmatprep.subr.bf16.mxu0 0
  %379 = vmatpush2.bf16.msra.mxu0 0
  %380 = vmatprep.mubr.bf16.mxu0 0
  %381 = vmatmul.mubr.bf16.gmra.mxu0 %v249
  %v382 = vpop.f32.mrf.mxu0
  %v383 = vadd.f32 %v85, %v382
  %v384 = vpop.f32.mrf.mxu0
  %v385 = vpop.f32.mrf.mxu0
  %v386 = vadd.f32 %v85, %v385
  %v387 = vpop.f32.mrf.mxu0
  %388 = vmatprep.mubr.bf16.mxu0 0
  %389 = vmatmul.mubr.bf16.gmra.mxu0 %v252
  %v390 = vpop.f32.mrf.mxu0
  %v391 = vadd.f32 %v85, %v390
  %v392 = vpop.f32.mrf.mxu0
  %v393 = vpop.f32.mrf.mxu0
  %v394 = vadd.f32 %v85, %v393
  %v395 = vpop.f32.mrf.mxu0
  %396 = vmatprep.mubr.bf16.mxu0 0
  %397 = vmatmul.mubr.bf16.gmra.mxu0 %v255
  %v398 = vpop.f32.mrf.mxu0
  %v399 = vadd.f32 %v85, %v398
  %v400 = vpop.f32.mrf.mxu0
  %v401 = vpop.f32.mrf.mxu0
  %v402 = vadd.f32 %v85, %v401
  %v403 = vpop.f32.mrf.mxu0
  %404 = vmatprep.mubr.bf16.mxu0 0
  %405 = vmatmul.mubr.bf16.gmra.mxu0 %v258
  %v406 = vpop.f32.mrf.mxu0
  %v407 = vadd.f32 %v85, %v406
  %v408 = vpop.f32.mrf.mxu0
  %v409 = vpop.f32.mrf.mxu0
  %v410 = vadd.f32 %v85, %v409
  %v411 = vpop.f32.mrf.mxu0
  %412 = vmatprep.mubr.bf16.mxu0 0
  %413 = vmatmul.mubr.bf16.gmra.mxu0 %v261
  %v414 = vpop.f32.mrf.mxu0
  %v415 = vadd.f32 %v85, %v414
  %v416 = vpop.f32.mrf.mxu0
  %v417 = vpop.f32.mrf.mxu0
  %v418 = vadd.f32 %v85, %v417
  %v419 = vpop.f32.mrf.mxu0
  %420 = vmatprep.mubr.bf16.mxu0 0
  %421 = vmatmul.mubr.bf16.gmra.mxu0 %v264
  %v422 = vpop.f32.mrf.mxu0
  %v423 = vadd.f32 %v85, %v422
  %v424 = vpop.f32.mrf.mxu0
  %v425 = vpop.f32.mrf.mxu0
  %v426 = vadd.f32 %v85, %v425
  %v427 = vpop.f32.mrf.mxu0
  %428 = vmatprep.mubr.bf16.mxu0 0
  %429 = vmatmul.mubr.bf16.gmra.mxu0 %v267
  %v430 = vpop.f32.mrf.mxu0
  %v431 = vadd.f32 %v85, %v430
  %v432 = vpop.f32.mrf.mxu0
  %v433 = vpop.f32.mrf.mxu0
  %v434 = vadd.f32 %v85, %v433
  %v435 = vpop.f32.mrf.mxu0
  %436 = vmatprep.mubr.bf16.mxu0 0
  %437 = vmatmul.mubr.bf16.gmra.mxu0 %v270
  %v438 = vpop.f32.mrf.mxu0
  %v439 = vadd.f32 %v85, %v438
  %v440 = vpop.f32.mrf.mxu0
  %v441 = vpop.f32.mrf.mxu0
  %v442 = vadd.f32 %v85, %v441
  %v443 = vpop.f32.mrf.mxu0
  %444 = vmatprep.mubr.bf16.mxu0 0
  %445 = vmatmul.mubr.bf16.gmra.mxu0 %v273
  %v446 = vpop.f32.mrf.mxu0
  %v447 = vadd.f32 %v85, %v446
  %v448 = vpop.f32.mrf.mxu0
  %v449 = vpop.f32.mrf.mxu0
  %v450 = vadd.f32 %v85, %v449
  %v451 = vpop.f32.mrf.mxu0
  %452 = vmatprep.mubr.bf16.mxu0 0
  %453 = vmatmul.mubr.bf16.gmra.mxu0 %v276
  %v454 = vpop.f32.mrf.mxu0
  %v455 = vadd.f32 %v85, %v454
  %v456 = vpop.f32.mrf.mxu0
  %v457 = vpop.f32.mrf.mxu0
  %v458 = vadd.f32 %v85, %v457
  %v459 = vpop.f32.mrf.mxu0
  %460 = vmatprep.mubr.bf16.mxu0 0
  %461 = vmatmul.mubr.bf16.gmra.mxu0 %v279
  %v462 = vpop.f32.mrf.mxu0
  %v463 = vadd.f32 %v85, %v462
  %v464 = vpop.f32.mrf.mxu0
  %v465 = vpop.f32.mrf.mxu0
  %v466 = vadd.f32 %v85, %v465
  %v467 = vpop.f32.mrf.mxu0
  %468 = vmatprep.mubr.bf16.mxu0 0
  %469 = vmatmul.mubr.bf16.gmra.mxu0 %v282
  %v470 = vpop.f32.mrf.mxu0
  %v471 = vadd.f32 %v85, %v470
  %v472 = vpop.f32.mrf.mxu0
  %v473 = vpop.f32.mrf.mxu0
  %v474 = vadd.f32 %v85, %v473
  %v475 = vpop.f32.mrf.mxu0
  %476 = vmatprep.mubr.bf16.mxu0 0
  %477 = vmatmul.mubr.bf16.gmra.mxu0 %v285
  %v478 = vpop.f32.mrf.mxu0
  %v479 = vadd.f32 %v85, %v478
  %v480 = vpop.f32.mrf.mxu0
  %v481 = vpop.f32.mrf.mxu0
  %v482 = vadd.f32 %v85, %v481
  %v483 = vpop.f32.mrf.mxu0
  %484 = vmatprep.mubr.bf16.mxu0 0
  %485 = vmatmul.mubr.bf16.gmra.mxu0 %v288
  %v486 = vpop.f32.mrf.mxu0
  %v487 = vadd.f32 %v85, %v486
  %v488 = vpop.f32.mrf.mxu0
  %v489 = vpop.f32.mrf.mxu0
  %v490 = vadd.f32 %v85, %v489
  %v491 = vpop.f32.mrf.mxu0
  %492 = vmatprep.mubr.bf16.mxu0 0
  %493 = vmatmul.mubr.bf16.gmra.mxu0 %v291
  %v494 = vpop.f32.mrf.mxu0
  %v495 = vadd.f32 %v85, %v494
  %v496 = vpop.f32.mrf.mxu0
  %v497 = vpop.f32.mrf.mxu0
  %v498 = vadd.f32 %v85, %v497
  %v499 = vpop.f32.mrf.mxu0
  %500 = vmatprep.mubr.bf16.mxu0 0
  %501 = vmatmul.mubr.bf16.gmra.mxu0 %v294
  %v502 = vpop.f32.mrf.mxu0
  %v503 = vadd.f32 %v85, %v502
  %v504 = vpop.f32.mrf.mxu0
  %v505 = vpop.f32.mrf.mxu0
  %v506 = vadd.f32 %v85, %v505
  %v507 = vpop.f32.mrf.mxu0
  %508 = vmatprep.mubr.bf16.mxu0 0
  %509 = vmatmul.mubr.bf16.gmra.mxu0 %v297
  %v510 = vpop.f32.mrf.mxu0
  %v511 = vadd.f32 %v85, %v510
  %v512 = vpop.f32.mrf.mxu0
  %v513 = vpop.f32.mrf.mxu0
  %v514 = vadd.f32 %v85, %v513
  %v515 = vpop.f32.mrf.mxu0
  %516 = vmatprep.mubr.bf16.mxu0 0
  %517 = vmatmul.mubr.bf16.gmra.mxu0 %v300
  %v518 = vpop.f32.mrf.mxu0
  %v519 = vadd.f32 %v85, %v518
  %v520 = vpop.f32.mrf.mxu0
  %v521 = vpop.f32.mrf.mxu0
  %v522 = vadd.f32 %v85, %v521
  %v523 = vpop.f32.mrf.mxu0
  %524 = vmatprep.mubr.bf16.mxu0 0
  %525 = vmatmul.mubr.bf16.gmra.mxu0 %v303
  %v526 = vpop.f32.mrf.mxu0
  %v527 = vadd.f32 %v85, %v526
  %v528 = vpop.f32.mrf.mxu0
  %v529 = vpop.f32.mrf.mxu0
  %v530 = vadd.f32 %v85, %v529
  %v531 = vpop.f32.mrf.mxu0
  %532 = vmatprep.mubr.bf16.mxu0 0
  %533 = vmatmul.mubr.bf16.gmra.mxu0 %v306
  %v534 = vpop.f32.mrf.mxu0
  %v535 = vadd.f32 %v85, %v534
  %v536 = vpop.f32.mrf.mxu0
  %v537 = vpop.f32.mrf.mxu0
  %v538 = vadd.f32 %v85, %v537
  %v539 = vpop.f32.mrf.mxu0
  %540 = vmatprep.mubr.bf16.mxu0 0
  %541 = vmatmul.mubr.bf16.gmra.mxu0 %v309
  %v542 = vpop.f32.mrf.mxu0
  %v543 = vadd.f32 %v85, %v542
  %v544 = vpop.f32.mrf.mxu0
  %v545 = vpop.f32.mrf.mxu0
  %v546 = vadd.f32 %v85, %v545
  %v547 = vpop.f32.mrf.mxu0
  %548 = vmatprep.mubr.bf16.mxu0 0
  %549 = vmatmul.mubr.bf16.gmra.mxu0 %v312
  %v550 = vpop.f32.mrf.mxu0
  %v551 = vadd.f32 %v85, %v550
  %v552 = vpop.f32.mrf.mxu0
  %v553 = vpop.f32.mrf.mxu0
  %v554 = vadd.f32 %v85, %v553
  %v555 = vpop.f32.mrf.mxu0
  %556 = vmatprep.mubr.bf16.mxu0 0
  %557 = vmatmul.mubr.bf16.gmra.mxu0 %v315
  %v558 = vpop.f32.mrf.mxu0
  %v559 = vadd.f32 %v85, %v558
  %v560 = vpop.f32.mrf.mxu0
  %v561 = vpop.f32.mrf.mxu0
  %v562 = vadd.f32 %v85, %v561
  %v563 = vpop.f32.mrf.mxu0
  %564 = vmatprep.mubr.bf16.mxu0 0
  %565 = vmatmul.mubr.bf16.gmra.mxu0 %v318
  %v566 = vpop.f32.mrf.mxu0
  %v567 = vadd.f32 %v85, %v566
  %v568 = vpop.f32.mrf.mxu0
  %v569 = vpop.f32.mrf.mxu0
  %v570 = vadd.f32 %v85, %v569
  %v571 = vpop.f32.mrf.mxu0
  %572 = vmatprep.mubr.bf16.mxu0 0
  %573 = vmatmul.mubr.bf16.gmra.mxu0 %v321
  %v574 = vpop.f32.mrf.mxu0
  %v575 = vadd.f32 %v85, %v574
  %v576 = vpop.f32.mrf.mxu0
  %v577 = vpop.f32.mrf.mxu0
  %v578 = vadd.f32 %v85, %v577
  %v579 = vpop.f32.mrf.mxu0
  %580 = vmatprep.mubr.bf16.mxu0 0
  %581 = vmatmul.mubr.bf16.gmra.mxu0 %v324
  %v582 = vpop.f32.mrf.mxu0
  %v583 = vadd.f32 %v85, %v582
  %v584 = vpop.f32.mrf.mxu0
  %v585 = vpop.f32.mrf.mxu0
  %v586 = vadd.f32 %v85, %v585
  %v587 = vpop.f32.mrf.mxu0
  %588 = vmatprep.mubr.bf16.mxu0 0
  %589 = vmatmul.mubr.bf16.gmra.mxu0 %v327
  %v590 = vpop.f32.mrf.mxu0
  %v591 = vadd.f32 %v85, %v590
  %v592 = vpop.f32.mrf.mxu0
  %v593 = vpop.f32.mrf.mxu0
  %v594 = vadd.f32 %v85, %v593
  %v595 = vpop.f32.mrf.mxu0
  %596 = vmatprep.mubr.bf16.mxu0 0
  %597 = vmatmul.mubr.bf16.gmra.mxu0 %v330
  %v598 = vpop.f32.mrf.mxu0
  %v599 = vadd.f32 %v85, %v598
  %v600 = vpop.f32.mrf.mxu0
  %v601 = vpop.f32.mrf.mxu0
  %v602 = vadd.f32 %v85, %v601
  %v603 = vpop.f32.mrf.mxu0
  %604 = vmatprep.mubr.bf16.mxu0 0
  %605 = vmatmul.mubr.bf16.gmra.mxu0 %v333
  %v606 = vpop.f32.mrf.mxu0
  %v607 = vadd.f32 %v85, %v606
  %v608 = vpop.f32.mrf.mxu0
  %v609 = vpop.f32.mrf.mxu0
  %v610 = vadd.f32 %v85, %v609
  %v611 = vpop.f32.mrf.mxu0
  %612 = vmatprep.mubr.bf16.mxu0 0
  %613 = vmatmul.mubr.bf16.gmra.mxu0 %v336
  %v614 = vpop.f32.mrf.mxu0
  %v615 = vadd.f32 %v85, %v614
  %v616 = vpop.f32.mrf.mxu0
  %v617 = vpop.f32.mrf.mxu0
  %v618 = vadd.f32 %v85, %v617
  %v619 = vpop.f32.mrf.mxu0
  %620 = vmatprep.mubr.bf16.mxu0 0
  %621 = vmatmul.mubr.bf16.gmra.mxu0 %v339
  %v622 = vpop.f32.mrf.mxu0
  %v623 = vadd.f32 %v85, %v622
  %v624 = vpop.f32.mrf.mxu0
  %v625 = vpop.f32.mrf.mxu0
  %v626 = vadd.f32 %v85, %v625
  %v627 = vpop.f32.mrf.mxu0
  %628 = vmatprep.mubr.bf16.mxu0 0
  %629 = vmatmul.mubr.bf16.gmra.mxu0 %v342
  %v630 = vpop.f32.mrf.mxu0
  %v631 = vadd.f32 %v85, %v630
  %v632 = vpop.f32.mrf.mxu0
  %v633 = vpop.f32.mrf.mxu0
  %v634 = vadd.f32 %v85, %v633
  %v635 = vpop.f32.mrf.mxu0
  %636 = vdwg.mxu0
  %v637 = vmax.f32 %v383, 0.0
  %v638 = vmax.f32 %v386, 0.0
  %v639 = vmax.f32 %v391, 0.0
  %v640 = vmax.f32 %v394, 0.0
  %v641 = vmax.f32 %v399, 0.0
  %v642 = vmax.f32 %v402, 0.0
  %v643 = vmax.f32 %v407, 0.0
  %v644 = vmax.f32 %v410, 0.0
  %v645 = vmax.f32 %v415, 0.0
  %v646 = vmax.f32 %v418, 0.0
  %v647 = vmax.f32 %v423, 0.0
  %v648 = vmax.f32 %v426, 0.0
  %v649 = vmax.f32 %v431, 0.0
  %v650 = vmax.f32 %v434, 0.0
  %v651 = vmax.f32 %v439, 0.0
  %v652 = vmax.f32 %v442, 0.0
  %v653 = vmax.f32 %v447, 0.0
  %v654 = vmax.f32 %v450, 0.0
  %v655 = vmax.f32 %v455, 0.0
  %v656 = vmax.f32 %v458, 0.0
  %v657 = vmax.f32 %v463, 0.0
  %v658 = vmax.f32 %v466, 0.0
  %v659 = vmax.f32 %v471, 0.0
  %v660 = vmax.f32 %v474, 0.0
  %v661 = vmax.f32 %v479, 0.0
  %v662 = vmax.f32 %v482, 0.0
  %v663 = vmax.f32 %v487, 0.0
  %v664 = vmax.f32 %v490, 0.0
  %v665 = vmax.f32 %v495, 0.0
  %v666 = vmax.f32 %v498, 0.0
  %v667 = vmax.f32 %v503, 0.0
  %v668 = vmax.f32 %v506, 0.0
  %v669 = vmax.f32 %v511, 0.0
  %v670 = vmax.f32 %v514, 0.0
  %v671 = vmax.f32 %v519, 0.0
  %v672 = vmax.f32 %v522, 0.0
  %v673 = vmax.f32 %v527, 0.0
  %v674 = vmax.f32 %v530, 0.0
  %v675 = vmax.f32 %v535, 0.0
  %v676 = vmax.f32 %v538, 0.0
  %v677 = vmax.f32 %v543, 0.0
  %v678 = vmax.f32 %v546, 0.0
  %v679 = vmax.f32 %v551, 0.0
  %v680 = vmax.f32 %v554, 0.0
  %v681 = vmax.f32 %v559, 0.0
  %v682 = vmax.f32 %v562, 0.0
  %v683 = vmax.f32 %v567, 0.0
  %v684 = vmax.f32 %v570, 0.0
  %v685 = vmax.f32 %v575, 0.0
  %v686 = vmax.f32 %v578, 0.0
  %v687 = vmax.f32 %v583, 0.0
  %v688 = vmax.f32 %v586, 0.0
  %v689 = vmax.f32 %v591, 0.0
  %v690 = vmax.f32 %v594, 0.0
  %v691 = vmax.f32 %v599, 0.0
  %v692 = vmax.f32 %v602, 0.0
  %v693 = vmax.f32 %v607, 0.0
  %v694 = vmax.f32 %v610, 0.0
  %v695 = vmax.f32 %v615, 0.0
  %v696 = vmax.f32 %v618, 0.0
  %v697 = vmax.f32 %v623, 0.0
  %v698 = vmax.f32 %v626, 0.0
  %v699 = vmax.f32 %v631, 0.0
  %v700 = vmax.f32 %v634, 0.0
  %v701 = vpack.c.bf16 %v638, %v637
  %v702 = vpack.c.bf16 %v640, %v639
  %v703 = vpack.c.bf16 %v642, %v641
  %v704 = vpack.c.bf16 %v644, %v643
  %v705 = vpack.c.bf16 %v646, %v645
  %v706 = vpack.c.bf16 %v648, %v647
  %v707 = vpack.c.bf16 %v650, %v649
  %v708 = vpack.c.bf16 %v652, %v651
  %v709 = vpack.c.bf16 %v654, %v653
  %v710 = vpack.c.bf16 %v656, %v655
  %v711 = vpack.c.bf16 %v658, %v657
  %v712 = vpack.c.bf16 %v660, %v659
  %v713 = vpack.c.bf16 %v662, %v661
  %v714 = vpack.c.bf16 %v664, %v663
  %v715 = vpack.c.bf16 %v666, %v665
  %v716 = vpack.c.bf16 %v668, %v667
  %v717 = vpack.c.bf16 %v670, %v669
  %v718 = vpack.c.bf16 %v672, %v671
  %v719 = vpack.c.bf16 %v674, %v673
  %v720 = vpack.c.bf16 %v676, %v675
  %v721 = vpack.c.bf16 %v678, %v677
  %v722 = vpack.c.bf16 %v680, %v679
  %v723 = vpack.c.bf16 %v682, %v681
  %v724 = vpack.c.bf16 %v684, %v683
  %v725 = vpack.c.bf16 %v686, %v685
  %v726 = vpack.c.bf16 %v688, %v687
  %v727 = vpack.c.bf16 %v690, %v689
  %v728 = vpack.c.bf16 %v692, %v691
  %v729 = vpack.c.bf16 %v694, %v693
  %v730 = vpack.c.bf16 %v696, %v695
  %v731 = vpack.c.bf16 %v698, %v697
  %v732 = vpack.c.bf16 %v700, %v699
  %v765 = vunpack.c.l.b16 %v701
  %v766 = vunpack.c.h.b16 %v701
  %v767 = vunpack.c.l.b16 %v702
  %v768 = vunpack.c.h.b16 %v702
  %v769 = vunpack.c.l.b16 %v703
  %v770 = vunpack.c.h.b16 %v703
  %v771 = vunpack.c.l.b16 %v704
  %v772 = vunpack.c.h.b16 %v704
  %v773 = vunpack.c.l.b16 %v705
  %v774 = vunpack.c.h.b16 %v705
  %v775 = vunpack.c.l.b16 %v706
  %v776 = vunpack.c.h.b16 %v706
  %v777 = vunpack.c.l.b16 %v707
  %v778 = vunpack.c.h.b16 %v707
  %v779 = vunpack.c.l.b16 %v708
  %v780 = vunpack.c.h.b16 %v708
  %v781 = vunpack.c.l.b16 %v709
  %v782 = vunpack.c.h.b16 %v709
  %v783 = vunpack.c.l.b16 %v710
  %v784 = vunpack.c.h.b16 %v710
  %v785 = vunpack.c.l.b16 %v711
  %v786 = vunpack.c.h.b16 %v711
  %v787 = vunpack.c.l.b16 %v712
  %v788 = vunpack.c.h.b16 %v712
  %v789 = vunpack.c.l.b16 %v713
  %v790 = vunpack.c.h.b16 %v713
  %v791 = vunpack.c.l.b16 %v714
  %v792 = vunpack.c.h.b16 %v714
  %v793 = vunpack.c.l.b16 %v715
  %v794 = vunpack.c.h.b16 %v715
  %v795 = vunpack.c.l.b16 %v716
  %v796 = vunpack.c.h.b16 %v716
  %v797 = vunpack.c.l.b16 %v717
  %v798 = vunpack.c.h.b16 %v717
  %v799 = vunpack.c.l.b16 %v718
  %v800 = vunpack.c.h.b16 %v718
  %v801 = vunpack.c.l.b16 %v719
  %v802 = vunpack.c.h.b16 %v719
  %v803 = vunpack.c.l.b16 %v720
  %v804 = vunpack.c.h.b16 %v720
  %v805 = vunpack.c.l.b16 %v721
  %v806 = vunpack.c.h.b16 %v721
  %v807 = vunpack.c.l.b16 %v722
  %v808 = vunpack.c.h.b16 %v722
  %v809 = vunpack.c.l.b16 %v723
  %v810 = vunpack.c.h.b16 %v723
  %v811 = vunpack.c.l.b16 %v724
  %v812 = vunpack.c.h.b16 %v724
  %v813 = vunpack.c.l.b16 %v725
  %v814 = vunpack.c.h.b16 %v725
  %v815 = vunpack.c.l.b16 %v726
  %v816 = vunpack.c.h.b16 %v726
  %v817 = vunpack.c.l.b16 %v727
  %v818 = vunpack.c.h.b16 %v727
  %v819 = vunpack.c.l.b16 %v728
  %v820 = vunpack.c.h.b16 %v728
  %v821 = vunpack.c.l.b16 %v729
  %v822 = vunpack.c.h.b16 %v729
  %v823 = vunpack.c.l.b16 %v730
  %v824 = vunpack.c.h.b16 %v730
  %v825 = vunpack.c.l.b16 %v731
  %v826 = vunpack.c.h.b16 %v731
  %v827 = vunpack.c.l.b16 %v732
  %v828 = vunpack.c.h.b16 %v732
  %v829 = vpack.c.b16 %v765, %v765
  %v830 = vpack.c.b16 %v766, %v766
  %v831 = vpack.c.b16 %v767, %v767
  %v832 = vpack.c.b16 %v768, %v768
  %v833 = vpack.c.b16 %v769, %v769
  %v834 = vpack.c.b16 %v770, %v770
  %v835 = vpack.c.b16 %v771, %v771
  %v836 = vpack.c.b16 %v772, %v772
  %v837 = vpack.c.b16 %v773, %v773
  %v838 = vpack.c.b16 %v774, %v774
  %v839 = vpack.c.b16 %v775, %v775
  %v840 = vpack.c.b16 %v776, %v776
  %v841 = vpack.c.b16 %v777, %v777
  %v842 = vpack.c.b16 %v778, %v778
  %v843 = vpack.c.b16 %v779, %v779
  %v844 = vpack.c.b16 %v780, %v780
  %v845 = vpack.c.b16 %v781, %v781
  %v846 = vpack.c.b16 %v782, %v782
  %v847 = vpack.c.b16 %v783, %v783
  %v848 = vpack.c.b16 %v784, %v784
  %v849 = vpack.c.b16 %v785, %v785
  %v850 = vpack.c.b16 %v786, %v786
  %v851 = vpack.c.b16 %v787, %v787
  %v852 = vpack.c.b16 %v788, %v788
  %v853 = vpack.c.b16 %v789, %v789
  %v854 = vpack.c.b16 %v790, %v790
  %v855 = vpack.c.b16 %v791, %v791
  %v856 = vpack.c.b16 %v792, %v792
  %v857 = vpack.c.b16 %v793, %v793
  %v858 = vpack.c.b16 %v794, %v794
  %v859 = vpack.c.b16 %v795, %v795
  %v860 = vpack.c.b16 %v796, %v796
  %v861 = vpack.c.b16 %v797, %v797
  %v862 = vpack.c.b16 %v798, %v798
  %v863 = vpack.c.b16 %v799, %v799
  %v864 = vpack.c.b16 %v800, %v800
  %v865 = vpack.c.b16 %v801, %v801
  %v866 = vpack.c.b16 %v802, %v802
  %v867 = vpack.c.b16 %v803, %v803
  %v868 = vpack.c.b16 %v804, %v804
  %v869 = vpack.c.b16 %v805, %v805
  %v870 = vpack.c.b16 %v806, %v806
  %v871 = vpack.c.b16 %v807, %v807
  %v872 = vpack.c.b16 %v808, %v808
  %v873 = vpack.c.b16 %v809, %v809
  %v874 = vpack.c.b16 %v810, %v810
  %v875 = vpack.c.b16 %v811, %v811
  %v876 = vpack.c.b16 %v812, %v812
  %v877 = vpack.c.b16 %v813, %v813
  %v878 = vpack.c.b16 %v814, %v814
  %v879 = vpack.c.b16 %v815, %v815
  %v880 = vpack.c.b16 %v816, %v816
  %v881 = vpack.c.b16 %v817, %v817
  %v882 = vpack.c.b16 %v818, %v818
  %v883 = vpack.c.b16 %v819, %v819
  %v884 = vpack.c.b16 %v820, %v820
  %v885 = vpack.c.b16 %v821, %v821
  %v886 = vpack.c.b16 %v822, %v822
  %v887 = vpack.c.b16 %v823, %v823
  %v888 = vpack.c.b16 %v824, %v824
  %v889 = vpack.c.b16 %v825, %v825
  %v890 = vpack.c.b16 %v826, %v826
  %v891 = vpack.c.b16 %v827, %v827
  %v892 = vpack.c.b16 %v828, %v828
  %957 = vst [vmem:[%s3] sm:$0xf] %v829
  %958 = vst [vmem:[%s3 + $0x4] sm:$0xf] %v830
  %959 = vst [vmem:[%s3 + $0x8] sm:$0xf] %v831
  %960 = vst [vmem:[%s3 + $0xc] sm:$0xf] %v832
  %961 = vst [vmem:[%s3 + $0x10] sm:$0xf] %v833
  %962 = vst [vmem:[%s3 + $0x14] sm:$0xf] %v834
  %963 = vst [vmem:[%s3 + $0x18] sm:$0xf] %v835
  %964 = vst [vmem:[%s3 + $0x1c] sm:$0xf] %v836
  %965 = vst [vmem:[%s3 + $0x20] sm:$0xf] %v837
  %966 = vst [vmem:[%s3 + $0x24] sm:$0xf] %v838
  %967 = vst [vmem:[%s3 + $0x28] sm:$0xf] %v839
  %968 = vst [vmem:[%s3 + $0x2c] sm:$0xf] %v840
  %969 = vst [vmem:[%s3 + $0x30] sm:$0xf] %v841
  %970 = vst [vmem:[%s3 + $0x34] sm:$0xf] %v842
  %971 = vst [vmem:[%s3 + $0x38] sm:$0xf] %v843
  %972 = vst [vmem:[%s3 + $0x3c] sm:$0xf] %v844
  %973 = vst [vmem:[%s3 + $0x40] sm:$0xf] %v845
  %974 = vst [vmem:[%s3 + $0x44] sm:$0xf] %v846
  %975 = vst [vmem:[%s3 + $0x48] sm:$0xf] %v847
  %976 = vst [vmem:[%s3 + $0x4c] sm:$0xf] %v848
  %977 = vst [vmem:[%s3 + $0x50] sm:$0xf] %v849
  %978 = vst [vmem:[%s3 + $0x54] sm:$0xf] %v850
  %979 = vst [vmem:[%s3 + $0x58] sm:$0xf] %v851
  %980 = vst [vmem:[%s3 + $0x5c] sm:$0xf] %v852
  %981 = vst [vmem:[%s3 + $0x60] sm:$0xf] %v853
  %982 = vst [vmem:[%s3 + $0x64] sm:$0xf] %v854
  %983 = vst [vmem:[%s3 + $0x68] sm:$0xf] %v855
  %984 = vst [vmem:[%s3 + $0x6c] sm:$0xf] %v856
  %985 = vst [vmem:[%s3 + $0x70] sm:$0xf] %v857
  %986 = vst [vmem:[%s3 + $0x74] sm:$0xf] %v858
  %987 = vst [vmem:[%s3 + $0x78] sm:$0xf] %v859
  %988 = vst [vmem:[%s3 + $0x7c] sm:$0xf] %v860
  %989 = vst [vmem:[%s3 + $0x80] sm:$0xf] %v861
  %990 = vst [vmem:[%s3 + $0x84] sm:$0xf] %v862
  %991 = vst [vmem:[%s3 + $0x88] sm:$0xf] %v863
  %992 = vst [vmem:[%s3 + $0x8c] sm:$0xf] %v864
  %993 = vst [vmem:[%s3 + $0x90] sm:$0xf] %v865
  %994 = vst [vmem:[%s3 + $0x94] sm:$0xf] %v866
  %995 = vst [vmem:[%s3 + $0x98] sm:$0xf] %v867
  %996 = vst [vmem:[%s3 + $0x9c] sm:$0xf] %v868
  %997 = vst [vmem:[%s3 + $0xa0] sm:$0xf] %v869
  %998 = vst [vmem:[%s3 + $0xa4] sm:$0xf] %v870
  %999 = vst [vmem:[%s3 + $0xa8] sm:$0xf] %v871
  %1000 = vst [vmem:[%s3 + $0xac] sm:$0xf] %v872
  %1001 = vst [vmem:[%s3 + $0xb0] sm:$0xf] %v873
  %1002 = vst [vmem:[%s3 + $0xb4] sm:$0xf] %v874
  %1003 = vst [vmem:[%s3 + $0xb8] sm:$0xf] %v875
  %1004 = vst [vmem:[%s3 + $0xbc] sm:$0xf] %v876
  %1005 = vst [vmem:[%s3 + $0xc0] sm:$0xf] %v877
  %1006 = vst [vmem:[%s3 + $0xc4] sm:$0xf] %v878
  %1007 = vst [vmem:[%s3 + $0xc8] sm:$0xf] %v879
  %1008 = vst [vmem:[%s3 + $0xcc] sm:$0xf] %v880
  %1009 = vst [vmem:[%s3 + $0xd0] sm:$0xf] %v881
  %1010 = vst [vmem:[%s3 + $0xd4] sm:$0xf] %v882
  %1011 = vst [vmem:[%s3 + $0xd8] sm:$0xf] %v883
  %1012 = vst [vmem:[%s3 + $0xdc] sm:$0xf] %v884
  %1013 = vst [vmem:[%s3 + $0xe0] sm:$0xf] %v885
  %1014 = vst [vmem:[%s3 + $0xe4] sm:$0xf] %v886
  %1015 = vst [vmem:[%s3 + $0xe8] sm:$0xf] %v887
  %1016 = vst [vmem:[%s3 + $0xec] sm:$0xf] %v888
  %1017 = vst [vmem:[%s3 + $0xf0] sm:$0xf] %v889
  %1018 = vst [vmem:[%s3 + $0xf4] sm:$0xf] %v890
  %1019 = vst [vmem:[%s3 + $0xf8] sm:$0xf] %v891
  %1020 = vst [vmem:[%s3 + $0xfc] sm:$0xf] %v892
  // Predicated region
  $region14: #{bottleneck_forward.4} parent=0 // pred_check
    _
  $region15: #{bottleneck_forward.4} parent=0 // pred_check_branch
    %1022 = sbr.rel (0) target = $region17
  $region16: #{bottleneck_forward.4} parent=0 // pred_region
    _
  $region17: #{bottleneck_forward.4} parent=0 // pred_fallthru
    _
  // Predicated region
  $region18: #{bottleneck_forward.4} parent=0 // pred_check
    _
  $region19: #{bottleneck_forward.4} parent=0 // pred_check_branch
    %1024 = sbr.rel (0) target = $region21
  $region20: #{bottleneck_forward.4} parent=0 // pred_region
    _
  $region21: #{bottleneck_forward.4} parent=0 // pred_fallthru
    _

// kernel: bottleneck_forward.5
$region0: #{bottleneck_forward.5}
  #allocation0 [shape = 'u32[]', space=smem, size = 0x4, offset = 0x4, fixed_abs, tag = 'smem constant byte address 0x4 - core index']
  #allocation1 [shape = 'u32[144,128]{1,0:T(1,128)}', space=vmem, size = 0x12000, scoped, tag = 'internal scratch']
  #allocation2 [shape = 'f32[128,128]{1,0:T(8,128)}', space=vmem, size = 0x10000, scoped, tag = 'scratch operand']
  %s0 = inlined_call_operand.vmem [shape: bf16[128,1152], index: 0, kind: input, shape index: {}]
  %s1 = inlined_call_operand.vmem [shape: bf16[1152,128], index: 1, kind: input, shape index: {}]
  %s2 = inlined_call_operand.vmem [shape: f32[1,128], index: 2, kind: input, shape index: {}]
  %s3 = inlined_call_operand.vmem [shape: bf16[128,128], index: 3, kind: output, shape index: {}]
  %s4 = sld [smem:[#allocation0]]
  $region79: #{bottleneck_forward.5} parent=0
    _
  %s6 = ssub.s32 1, %s4
  %s7 = scalar_select 0, %s6, %s4
  $region1: #{bottleneck_forward.5} parent=0
    #allocation3 [shape = 'u8[196608]{0}', space=vmem, size = 0x30000, scoped, tag = 'input window, operand 0']
    loop: start=0, step=1, limit=5
    $region2: #{bottleneck_forward.5} parent=1 // loop_pre_header
      _
    $region3: #{bottleneck_forward.5} parent=1 // loop_header
      %s9 = sphi 0, %s13
      %p10 = scmp.ge.s32.totalorder %s9, 5
      %s16 = sphi 0, %s35
      %s17 = sphi 0, %s31
      %s18 = sphi 0, %s27
      %s19 = sphi 0, %s16
      %s20 = sphi 0, %s17
      %s21 = sphi 0, %s18
      %s22 = sphi 0, %s19
      %s23 = sphi 0, %s20
      %s24 = sphi 0, %s21
      %s40 = sphi 0, %s42
      %s43 = sphi 0, %s40
      %s44 = sphi 0, %s43
      %s60 = sphi 0, %s44
      %s68 = sphi 0, %s70
      %s71 = sphi 0, %s68
      %s72 = sphi 0, %s71
      %s88 = sphi 0, %s72
      %s94 = sphi 0, %s96
      %s97 = sphi 0, %s94
      %s98 = sphi 0, %s97
      %s114 = sphi 0, %s98
      %s122 = sphi 0, %s124
      %s125 = sphi 0, %s122
      %s126 = sphi 0, %s125
      %s142 = sphi 0, %s126
    $region4: #{bottleneck_forward.5} parent=1 // loop_header_branch
      %12 = sbr.rel (%p10) target = $region8
    $region5: #{bottleneck_forward.5} parent=1 // loop_body
      %s14 = ssub.s32 %s9, 1
      %s15 = ssub.s32 %s9, 2
      %s25 = sadd.s32 1, %s18
      %p26 = scmp.ge.s32.totalorder %s25, 3
      %s27 = scalar_select %p26, 0, %s25
      %s28 = sadd.s32 1, %s17
      %s29 = scalar_select %p26, %s28, %s17
      %p30 = scmp.ge.s32.totalorder %s29, 1
      %s31 = scalar_select %p30, 0, %s29
      %s32 = sadd.s32 1, %s16
      %s33 = scalar_select %p30, %s32, %s16
      %p34 = scmp.ge.s32.totalorder %s33, 1
      %s35 = scalar_select %p34, 0, %s33
      %s36 = ssub.s32 %s16, %s35
      %s37 = ssub.s32 %s18, %s27
      %s38 = sor.u32 %s36, %s37
      %p39 = scmp.eq.s32.totalorder %s38, 0
      %s41 = sadd.s32 %s40, 1
      %s42 = scalar_select %p39, %s40, %s41
      %p45 = pneg %p39
      %p46 = scmp.eq.s32.totalorder %s9, 2
      %p47 = por %p45, %p46
      %p48 = scmp.ne.s32.totalorder %s40, %s43
      %p49 = scmp.eq.s32.totalorder %s9, 0
      %p50 = por %p48, %p49
      %p51 = scmp.ne.s32.totalorder %s40, %s43
      %p52 = scmp.eq.s32.totalorder %s14, 2
      %p53 = por %p51, %p52
      %p54 = scmp.ne.s32.totalorder %s43, %s44
      %p55 = scmp.eq.s32.totalorder %s14, 0
      %p56 = por %p54, %p55
      %p57 = scmp.ne.s32.totalorder %s43, %s44
      %p58 = scmp.eq.s32.totalorder %s15, 2
      %p59 = por %p57, %p58
      %p61 = scmp.ne.s32.totalorder %s44, %s60
      %p62 = scmp.eq.s32.totalorder %s15, 0
      %p63 = por %p61, %p62
      %s64 = ssub.s32 %s18, %s27
      %s65 = ssub.s32 %s17, %s31
      %s66 = sor.u32 %s64, %s65
      %p67 = scmp.eq.s32.totalorder %s66, 0
      %s69 = sadd.s32 %s68, 1
      %s70 = scalar_select %p67, %s68, %s69
      %p73 = pneg %p67
      %p74 = scmp.eq.s32.totalorder %s9, 2
      %p75 = por %p73, %p74
      %p76 = scmp.ne.s32.totalorder %s68, %s71
      %p77 = scmp.eq.s32.totalorder %s9, 0
      %p78 = por %p76, %p77
      %p79 = scmp.ne.s32.totalorder %s68, %s71
      %p80 = scmp.eq.s32.totalorder %s14, 2
      %p81 = por %p79, %p80
      %p82 = scmp.ne.s32.totalorder %s71, %s72
      %p83 = scmp.eq.s32.totalorder %s14, 0
      %p84 = por %p82, %p83
      %p85 = scmp.ne.s32.totalorder %s71, %s72
      %p86 = scmp.eq.s32.totalorder %s15, 2
      %p87 = por %p85, %p86
      %p89 = scmp.ne.s32.totalorder %s72, %s88
      %p90 = scmp.eq.s32.totalorder %s15, 0
      %p91 = por %p89, %p90
      %s92 = ssub.s32 %s17, %s31
      %p93 = scmp.eq.s32.totalorder %s92, 0
      %s95 = sadd.s32 %s94, 1
      %s96 = scalar_select %p93, %s94, %s95
      %p99 = pneg %p93
      %p100 = scmp.eq.s32.totalorder %s9, 2
      %p101 = por %p99, %p100
      %p102 = scmp.ne.s32.totalorder %s94, %s97
      %p103 = scmp.eq.s32.totalorder %s9, 0
      %p104 = por %p102, %p103
      %p105 = scmp.ne.s32.totalorder %s94, %s97
      %p106 = scmp.eq.s32.totalorder %s14, 2
      %p107 = por %p105, %p106
      %p108 = scmp.ne.s32.totalorder %s97, %s98
      %p109 = scmp.eq.s32.totalorder %s14, 0
      %p110 = por %p108, %p109
      %p111 = scmp.ne.s32.totalorder %s97, %s98
      %p112 = scmp.eq.s32.totalorder %s15, 2
      %p113 = por %p111, %p112
      %p115 = scmp.ne.s32.totalorder %s98, %s114
      %p116 = scmp.eq.s32.totalorder %s15, 0
      %p117 = por %p115, %p116
      %s118 = ssub.s32 %s16, %s35
      %s119 = ssub.s32 %s17, %s31
      %s120 = sor.u32 %s118, %s119
      %p121 = scmp.eq.s32.totalorder %s120, 0
      %s123 = sadd.s32 %s122, 1
      %s124 = scalar_select %p121, %s122, %s123
      %p127 = pneg %p121
      %p128 = scmp.eq.s32.totalorder %s9, 2
      %p129 = por %p127, %p128
      %p130 = scmp.ne.s32.totalorder %s122, %s125
      %p131 = scmp.eq.s32.totalorder %s9, 0
      %p132 = por %p130, %p131
      %p133 = scmp.ne.s32.totalorder %s122, %s125
      %p134 = scmp.eq.s32.totalorder %s14, 2
      %p135 = por %p133, %p134
      %p136 = scmp.ne.s32.totalorder %s125, %s126
      %p137 = scmp.eq.s32.totalorder %s14, 0
      %p138 = por %p136, %p137
      %p139 = scmp.ne.s32.totalorder %s125, %s126
      %p140 = scmp.eq.s32.totalorder %s15, 2
      %p141 = por %p139, %p140
      %p143 = scmp.ne.s32.totalorder %s126, %s142
      %p144 = scmp.eq.s32.totalorder %s15, 0
      %p145 = por %p143, %p144
      %p146 = scmp.le.s32.totalorder 1, %s9
      %p147 = scmp.lt.s32.totalorder %s9, 4
      %p148 = pnand %p146, %p147
      %p149 = pneg %p148
      // Predicated region
      $region9: #{bottleneck_forward.5} parent=5 // pred_check
        _
      $region10: #{bottleneck_forward.5} parent=5 // pred_check_branch
        %151 = sbr.rel (%p148) target = $region12
      $region11: #{bottleneck_forward.5} parent=5 // pred_region
        %s152 = ssub.s32 %s9, 1
        // Predicated region
        $region13: #{bottleneck_forward.5} parent=11 // pred_check
          %p153 = pneg %p110
        $region14: #{bottleneck_forward.5} parent=11 // pred_check_branch
          %155 = sbr.rel (%p153) target = $region16
        $region15: #{bottleneck_forward.5} parent=11 // pred_region
          %p156 = scmp.lt.s32.totalorder %s20, 0
          %s157 = scalar_select %p156, %s20, 0
          %s158 = scalar_lea.vmem %s2, %s157
        $region16: #{bottleneck_forward.5} parent=11 // pred_fallthru
          _
      $region12: #{bottleneck_forward.5} parent=5 // pred_fallthru
        _
      %p159 = scmp.lt.s32.totalorder %s9, 3
      // Predicated region
      $region17: #{bottleneck_forward.5} parent=5 // pred_check
        %p160 = pneg %p159
      $region18: #{bottleneck_forward.5} parent=5 // pred_check_branch
        %162 = sbr.rel (%p160) target = $region20
      $region19: #{bottleneck_forward.5} parent=5 // pred_region
        // Predicated region
        $region21: #{bottleneck_forward.5} parent=19 // pred_check
          %p163 = pneg %p50
        $region22: #{bottleneck_forward.5} parent=19 // pred_check_branch
          %165 = sbr.rel (%p163) target = $region24
        $region23: #{bottleneck_forward.5} parent=19 // pred_region
          %s166 = sand.u32 %s40, 1
          %s167 = sand.u32 %s40, 1
          %s168 = smul.addr %s167, 192
          %s169 = scalar_lea.vmem [#allocation3], %s168
          %s170 = smul.u32 16, %s16
          %s171 = smul.u32 3, %s18
          %s172 = smul.addr %s170, 9
          %s173 = sadd.s32 %s171, %s172
          %s174 = smul.addr %s173, 4
          %s175 = scalar_lea.vmem %s0, %s174
          // Predicated region
          $region25: #{bottleneck_forward.5} parent=23 // pred_check
            _
          $region26: #{bottleneck_forward.5} parent=23 // pred_check_branch
            %177 = sbr.rel (0) target = $region28
          $region27: #{bottleneck_forward.5} parent=23 // pred_region
            // Predicated region
            $region29: #{bottleneck_forward.5} parent=27 // pred_check
              _
            $region30: #{bottleneck_forward.5} parent=27 // pred_check_branch
              %179 = sbr.rel (0) target = $region32
            $region31: #{bottleneck_forward.5} parent=27 // pred_region
              %s180 = scalar_lea.vmem %s175, 8
              %s181 = scalar_lea.vmem %s169, 8 [#allocation3]
              loop: start=0, step=1, limit=1
              $region33: #{bottleneck_forward.5} parent=31 // loop_pre_header
                _
              $region34: #{bottleneck_forward.5} parent=31 // loop_header
                %s183 = sphi 0, %s187
                %p184 = scmp.ge.s32.totalorder %s183, 1
                %s188 = sphi %s175, %s175
                %s189 = sphi %s169, %s169
              $region35: #{bottleneck_forward.5} parent=31 // loop_header_branch
                %186 = sbr.rel (%p184) target = $region39
              $region36: #{bottleneck_forward.5} parent=31 // loop_body
                %v190 = vld [vmem:[%s188] sm:$0xff]
                %191 = vst [vmem:[%s189] sm:$0xff] %v190
                %v192 = vld [vmem:[%s188 + $0x24] sm:$0xff]
                %193 = vst [vmem:[%s189 + $0xc] sm:$0xff] %v192
                %v194 = vld [vmem:[%s188 + $0x48] sm:$0xff]
                %195 = vst [vmem:[%s189 + $0x18] sm:$0xff] %v194
                %v196 = vld [vmem:[%s188 + $0x6c] sm:$0xff]
                %197 = vst [vmem:[%s189 + $0x24] sm:$0xff] %v196
                %v198 = vld [vmem:[%s188 + $0x90] sm:$0xff]
                %199 = vst [vmem:[%s189 + $0x30] sm:$0xff] %v198
                %v200 = vld [vmem:[%s188 + $0xb4] sm:$0xff]
                %201 = vst [vmem:[%s189 + $0x3c] sm:$0xff] %v200
                %v202 = vld [vmem:[%s188 + $0xd8] sm:$0xff]
                %203 = vst [vmem:[%s189 + $0x48] sm:$0xff] %v202
                %v204 = vld [vmem:[%s188 + $0xfc] sm:$0xff]
                %205 = vst [vmem:[%s189 + $0x54] sm:$0xff] %v204
                %v206 = vld [vmem:[%s188 + $0x120] sm:$0xff]
                %207 = vst [vmem:[%s189 + $0x60] sm:$0xff] %v206
                %v208 = vld [vmem:[%s188 + $0x144] sm:$0xff]
                %209 = vst [vmem:[%s189 + $0x6c] sm:$0xff] %v208
                %v210 = vld [vmem:[%s188 + $0x168] sm:$0xff]
                %211 = vst [vmem:[%s189 + $0x78] sm:$0xff] %v210
                %v212 = vld [vmem:[%s188 + $0x18c] sm:$0xff]
                %213 = vst [vmem:[%s189 + $0x84] sm:$0xff] %v212
                %v214 = vld [vmem:[%s188 + $0x1b0] sm:$0xff]
                %215 = vst [vmem:[%s189 + $0x90] sm:$0xff] %v214
                %v216 = vld [vmem:[%s188 + $0x1d4] sm:$0xff]
                %217 = vst [vmem:[%s189 + $0x9c] sm:$0xff] %v216
                %v218 = vld [vmem:[%s188 + $0x1f8] sm:$0xff]
                %219 = vst [vmem:[%s189 + $0xa8] sm:$0xff] %v218
                %v220 = vld [vmem:[%s188 + $0x21c] sm:$0xff]
                %221 = vst [vmem:[%s189 + $0xb4] sm:$0xff] %v220
              $region37: #{bottleneck_forward.5} parent=31 // loop_footer
                %s187 = sadd.s32 1, %s183
              $region38: #{bottleneck_forward.5} parent=31 // loop_footer_branch
                %182 = sbr.rel target = $region34
              $region39: #{bottleneck_forward.5} parent=31 // loop_exit
                _
              %s223 = ssub.s32 16, 1
              loop: start=0, step=1, limit=1
              $region40: #{bottleneck_forward.5} parent=31 // loop_pre_header
                _
              $region41: #{bottleneck_forward.5} parent=31 // loop_header
                %s225 = sphi 0, %s229
                %p226 = scmp.ge.s32.totalorder %s225, 1
                %s230 = sphi %s180, %s180
                %s231 = sphi %s181, %s181
              $region42: #{bottleneck_forward.5} parent=31 // loop_header_branch
                %228 = sbr.rel (%p226) target = $region46
              $region43: #{bottleneck_forward.5} parent=31 // loop_body
                %v232 = vld [vmem:[%s230] sm:%s223]
                %233 = vst [vmem:[%s231] sm:%s223] %v232
                %v234 = vld [vmem:[%s230 + $0x24] sm:%s223]
                %235 = vst [vmem:[%s231 + $0xc] sm:%s223] %v234
                %v236 = vld [vmem:[%s230 + $0x48] sm:%s223]
                %237 = vst [vmem:[%s231 + $0x18] sm:%s223] %v236
                %v238 = vld [vmem:[%s230 + $0x6c] sm:%s223]
                %239 = vst [vmem:[%s231 + $0x24] sm:%s223] %v238
                %v240 = vld [vmem:[%s230 + $0x90] sm:%s223]
                %241 = vst [vmem:[%s231 + $0x30] sm:%s223] %v240
                %v242 = vld [vmem:[%s230 + $0xb4] sm:%s223]
                %243 = vst [vmem:[%s231 + $0x3c] sm:%s223] %v242
                %v244 = vld [vmem:[%s230 + $0xd8] sm:%s223]
                %245 = vst [vmem:[%s231 + $0x48] sm:%s223] %v244
                %v246 = vld [vmem:[%s230 + $0xfc] sm:%s223]
                %247 = vst [vmem:[%s231 + $0x54] sm:%s223] %v246
                %v248 = vld [vmem:[%s230 + $0x120] sm:%s223]
                %249 = vst [vmem:[%s231 + $0x60] sm:%s223] %v248
                %v250 = vld [vmem:[%s230 + $0x144] sm:%s223]
                %251 = vst [vmem:[%s231 + $0x6c] sm:%s223] %v250
                %v252 = vld [vmem:[%s230 + $0x168] sm:%s223]
                %253 = vst [vmem:[%s231 + $0x78] sm:%s223] %v252
                %v254 = vld [vmem:[%s230 + $0x18c] sm:%s223]
                %255 = vst [vmem:[%s231 + $0x84] sm:%s223] %v254
                %v256 = vld [vmem:[%s230 + $0x1b0] sm:%s223]
                %257 = vst [vmem:[%s231 + $0x90] sm:%s223] %v256
                %v258 = vld [vmem:[%s230 + $0x1d4] sm:%s223]
                %259 = vst [vmem:[%s231 + $0x9c] sm:%s223] %v258
                %v260 = vld [vmem:[%s230 + $0x1f8] sm:%s223]
                %261 = vst [vmem:[%s231 + $0xa8] sm:%s223] %v260
                %v262 = vld [vmem:[%s230 + $0x21c] sm:%s223]
                %263 = vst [vmem:[%s231 + $0xb4] sm:%s223] %v262
              $region44: #{bottleneck_forward.5} parent=31 // loop_footer
                %s229 = sadd.s32 1, %s225
              $region45: #{bottleneck_forward.5} parent=31 // loop_footer_branch
                %224 = sbr.rel target = $region41
              $region46: #{bottleneck_forward.5} parent=31 // loop_exit
                _
            $region32: #{bottleneck_forward.5} parent=27 // pred_fallthru
              _
          $region28: #{bottleneck_forward.5} parent=23 // pred_fallthru
            _
          %264 = vnop
        $region24: #{bottleneck_forward.5} parent=19 // pred_fallthru
          _
        // Predicated region
        $region47: #{bottleneck_forward.5} parent=19 // pred_check
          %p265 = pneg %p78
        $region48: #{bottleneck_forward.5} parent=19 // pred_check_branch
          %267 = sbr.rel (%p265) target = $region50
        $region49: #{bottleneck_forward.5} parent=19 // pred_region
          %s268 = smul.u32 48, %s18
          %p269 = scmp.lt.s32.totalorder %s268, 143
          %s270 = scalar_select %p269, %s268, 143
          %p271 = scmp.lt.s32.totalorder %s17, 0
          %s272 = scalar_select %p271, %s17, 0
          %s273 = sadd.s32 %s272, %s270
          %s274 = smul.addr %s273, 4
          %s275 = scalar_lea.vmem %s1, %s274
          %s276 = smul.u32 48, %s18
        $region50: #{bottleneck_forward.5} parent=19 // pred_fallthru
          _
      $region20: #{bottleneck_forward.5} parent=5 // pred_fallthru
        _
      %p277 = scmp.le.s32.totalorder 1, %s9
      %p278 = scmp.lt.s32.totalorder %s9, 4
      %p279 = pnand %p277, %p278
      %p280 = pneg %p279
      // Predicated region
      $region51: #{bottleneck_forward.5} parent=5 // pred_check
        _
      $region52: #{bottleneck_forward.5} parent=5 // pred_check_branch
        %282 = sbr.rel (%p279) target = $region54
      $region53: #{bottleneck_forward.5} parent=5 // pred_region
        %s283 = ssub.s32 %s9, 1
        %s284 = sand.u32 %s43, 1
        %s285 = sand.u32 %s43, 1
        %s286 = smul.addr %s285, 192
        %s287 = scalar_lea.vmem [#allocation3], %s286
        // Predicated region
        $region55: #{bottleneck_forward.5} parent=53 // pred_check
          %p288 = pneg %p56
        $region56: #{bottleneck_forward.5} parent=53 // pred_check_branch
          %290 = sbr.rel (%p288) target = $region58
        $region57: #{bottleneck_forward.5} parent=53 // pred_region
          _
        $region58: #{bottleneck_forward.5} parent=53 // pred_fallthru
          _
        %s291 = sand.u32 %s43, 1
        %s292 = sand.u32 %s43, 1
        %s293 = smul.addr %s292, 192
        %s294 = scalar_lea.vmem [#allocation3], %s293
        %p295 = pneg %p56
        %p296 = pneg %p53
        %s297 = smul.u32 48, %s21
        %p298 = scmp.lt.s32.totalorder %s297, 143
        %s299 = scalar_select %p298, %s297, 143
        %p300 = scmp.lt.s32.totalorder %s20, 0
        %s301 = scalar_select %p300, %s20, 0
        %s302 = sadd.s32 %s301, %s299
        %s303 = smul.addr %s302, 4
        %s304 = scalar_lea.vmem %s1, %s303
        %p305 = pneg %p84
        %p306 = pneg %p81
        %p307 = scmp.lt.s32.totalorder %s20, 0
        %s308 = scalar_select %p307, %s20, 0
        %s309 = scalar_lea.vmem %s2, %s308
        %p310 = pneg %p110
        %p311 = pneg %p107
        %p312 = pneg %p138
        %p313 = pneg %p135
        %s314 = smul.u32 16, %s19
        %p315 = scmp.lt.s32.totalorder %s314, 15
        %s316 = scalar_select %p315, %s314, 15
        %p317 = scmp.lt.s32.totalorder %s20, 0
        %s318 = scalar_select %p317, %s20, 0
        %s319 = sadd.s32 %s318, %s316
        %s320 = smul.addr %s319, 4
        %s321 = scalar_lea.vmem %s3, %s320
        %s322 = smul.u32 16, %s19
        %s323 = smul.u32 3, %s21
        %s324 = smul.u32 48, %s21
        %p325 = scmp.lt.s32.totalorder %s324, 143
        %s326 = scalar_select %p325, %s324, 143
        %p327 = scmp.lt.s32.totalorder %s20, 0
        %s328 = scalar_select %p327, %s20, 0
        %s329 = sadd.s32 %s328, %s326
        %s330 = smul.addr %s329, 4
        %s331 = scalar_lea.vmem %s1, %s330
        %s332 = smul.u32 48, %s21
        %p333 = scmp.lt.s32.totalorder %s20, 0
        %s334 = scalar_select %p333, %s20, 0
        %s335 = scalar_lea.vmem %s2, %s334
        %s336 = smul.u32 16, %s19
        %p337 = scmp.lt.s32.totalorder %s336, 15
        %s338 = scalar_select %p337, %s336, 15
        %p339 = scmp.lt.s32.totalorder %s20, 0
        %s340 = scalar_select %p339, %s20, 0
        %s341 = sadd.s32 %s340, %s338
        %s342 = smul.addr %s341, 4
        %s343 = scalar_lea.vmem %s3, %s342
        %s344 = smul.u32 16, %s19
        %p346 = scmp.eq.s32.totalorder %s21, 0
        // Predicated region
        $region59: #{bottleneck_forward.5} parent=53 // pred_check
          %p347 = pneg %p346
        $region60: #{bottleneck_forward.5} parent=53 // pred_check_branch
          %349 = sbr.rel (%p347) target = $region62
        $region61: #{bottleneck_forward.5} parent=53 // pred_region
          %350 = vst [vmem:[#allocation2] sm:$0xff] 0.0
          %351 = vst [vmem:[#allocation2 + $0x8] sm:$0xff] 0.0
          %352 = vst [vmem:[#allocation2 + $0x10] sm:$0xff] 0.0
          %353 = vst [vmem:[#allocation2 + $0x18] sm:$0xff] 0.0
          %354 = vst [vmem:[#allocation2 + $0x20] sm:$0xff] 0.0
          %355 = vst [vmem:[#allocation2 + $0x28] sm:$0xff] 0.0
          %356 = vst [vmem:[#allocation2 + $0x30] sm:$0xff] 0.0
          %357 = vst [vmem:[#allocation2 + $0x38] sm:$0xff] 0.0
          %358 = vst [vmem:[#allocation2 + $0x40] sm:$0xff] 0.0
          %359 = vst [vmem:[#allocation2 + $0x48] sm:$0xff] 0.0
          %360 = vst [vmem:[#allocation2 + $0x50] sm:$0xff] 0.0
          %361 = vst [vmem:[#allocation2 + $0x58] sm:$0xff] 0.0
          %362 = vst [vmem:[#allocation2 + $0x60] sm:$0xff] 0.0
          %363 = vst [vmem:[#allocation2 + $0x68] sm:$0xff] 0.0
          %364 = vst [vmem:[#allocation2 + $0x70] sm:$0xff] 0.0
          %365 = vst [vmem:[#allocation2 + $0x78] sm:$0xff] 0.0
        $region62: #{bottleneck_forward.5} parent=53 // pred_fallthru
          _
        %v366 = vld [vmem:[#allocation2] sm:$0xff]
        %v367 = vld [vmem:[#allocation2 + $0x8] sm:$0xff]
        %v368 = vld [vmem:[#allocation2 + $0x10] sm:$0xff]
        %v369 = vld [vmem:[#allocation2 + $0x18] sm:$0xff]
        %v370 = vld [vmem:[#allocation2 + $0x20] sm:$0xff]
        %v371 = vld [vmem:[#allocation2 + $0x28] sm:$0xff]
        %v372 = vld [vmem:[#allocation2 + $0x30] sm:$0xff]
        %v373 = vld [vmem:[#allocation2 + $0x38] sm:$0xff]
        %v374 = vld [vmem:[#allocation2 + $0x40] sm:$0xff]
        %v375 = vld [vmem:[#allocation2 + $0x48] sm:$0xff]
        %v376 = vld [vmem:[#allocation2 + $0x50] sm:$0xff]
        %v377 = vld [vmem:[#allocation2 + $0x58] sm:$0xff]
        %v378 = vld [vmem:[#allocation2 + $0x60] sm:$0xff]
        %v379 = vld [vmem:[#allocation2 + $0x68] sm:$0xff]
        %v380 = vld [vmem:[#allocation2 + $0x70] sm:$0xff]
        %v381 = vld [vmem:[#allocation2 + $0x78] sm:$0xff]
        %v382 = vld [vmem:[%s287] sm:$0xff]
        %v383 = vld [vmem:[%s287 + $0x8] sm:$0xf]
        %v384 = vld [vmem:[%s287 + $0xc] sm:$0xff]
        %v385 = vld [vmem:[%s287 + $0x14] sm:$0xf]
        %v386 = vld [vmem:[%s287 + $0x18] sm:$0xff]
        %v387 = vld [vmem:[%s287 + $0x20] sm:$0xf]
        %v388 = vld [vmem:[%s287 + $0x24] sm:$0xff]
        %v389 = vld [vmem:[%s287 + $0x2c] sm:$0xf]
        %v390 = vld [vmem:[%s287 + $0x30] sm:$0xff]
        %v391 = vld [vmem:[%s287 + $0x38] sm:$0xf]
        %v392 = vld [vmem:[%s287 + $0x3c] sm:$0xff]
        %v393 = vld [vmem:[%s287 + $0x44] sm:$0xf]
        %v394 = vld [vmem:[%s287 + $0x48] sm:$0xff]
        %v395 = vld [vmem:[%s287 + $0x50] sm:$0xf]
        %v396 = vld [vmem:[%s287 + $0x54] sm:$0xff]
        %v397 = vld [vmem:[%s287 + $0x5c] sm:$0xf]
        %v398 = vld [vmem:[%s287 + $0x60] sm:$0xff]
        %v399 = vld [vmem:[%s287 + $0x68] sm:$0xf]
        %v400 = vld [vmem:[%s287 + $0x6c] sm:$0xff]
        %v401 = vld [vmem:[%s287 + $0x74] sm:$0xf]
        %v402 = vld [vmem:[%s287 + $0x78] sm:$0xff]
        %v403 = vld [vmem:[%s287 + $0x80] sm:$0xf]
        %v404 = vld [vmem:[%s287 + $0x84] sm:$0xff]
        %v405 = vld [vmem:[%s287 + $0x8c] sm:$0xf]
        %v406 = vld [vmem:[%s287 + $0x90] sm:$0xff]
        %v407 = vld [vmem:[%s287 + $0x98] sm:$0xf]
        %v408 = vld [vmem:[%s287 + $0x9c] sm:$0xff]
        %v409 = vld [vmem:[%s287 + $0xa4] sm:$0xf]
        %v410 = vld [vmem:[%s287 + $0xa8] sm:$0xff]
        %v411 = vld [vmem:[%s287 + $0xb0] sm:$0xf]
        %v412 = vld [vmem:[%s287 + $0xb4] sm:$0xff]
        %v413 = vld [vmem:[%s287 + $0xbc] sm:$0xf]
        %v414 = vld [vmem:[%s331] sm:$0xf]
        %v415 = vld [vmem:[%s331 + $0x4] sm:$0xf]
        %v416 = vld [vmem:[%s331 + $0x8] sm:$0xf]
        %v417 = vld [vmem:[%s331 + $0xc] sm:$0xf]
        %v418 = vld [vmem:[%s331 + $0x10] sm:$0xf]
        %v419 = vld [vmem:[%s331 + $0x14] sm:$0xf]
        %v420 = vld [vmem:[%s331 + $0x18] sm:$0xf]
        %v421 = vld [vmem:[%s331 + $0x1c] sm:$0xf]
        %v422 = vld [vmem:[%s331 + $0x20] sm:$0xf]
        %v423 = vld [vmem:[%s331 + $0x24] sm:$0xf]
        %v424 = vld [vmem:[%s331 + $0x28] sm:$0xf]
        %v425 = vld [vmem:[%s331 + $0x2c] sm:$0xf]
        %v426 = vld [vmem:[%s331 + $0x30] sm:$0xf]
        %v427 = vld [vmem:[%s331 + $0x34] sm:$0xf]
        %v428 = vld [vmem:[%s331 + $0x38] sm:$0xf]
        %v429 = vld [vmem:[%s331 + $0x3c] sm:$0xf]
        %v430 = vld [vmem:[%s331 + $0x40] sm:$0xf]
        %v431 = vld [vmem:[%s331 + $0x44] sm:$0xf]
        %v432 = vld [vmem:[%s331 + $0x48] sm:$0xf]
        %v433 = vld [vmem:[%s331 + $0x4c] sm:$0xf]
        %v434 = vld [vmem:[%s331 + $0x50] sm:$0xf]
        %v435 = vld [vmem:[%s331 + $0x54] sm:$0xf]
        %v436 = vld [vmem:[%s331 + $0x58] sm:$0xf]
        %v437 = vld [vmem:[%s331 + $0x5c] sm:$0xf]
        %v438 = vld [vmem:[%s331 + $0x60] sm:$0xf]
        %v439 = vld [vmem:[%s331 + $0x64] sm:$0xf]
        %v440 = vld [vmem:[%s331 + $0x68] sm:$0xf]
        %v441 = vld [vmem:[%s331 + $0x6c] sm:$0xf]
        %v442 = vld [vmem:[%s331 + $0x70] sm:$0xf]
        %v443 = vld [vmem:[%s331 + $0x74] sm:$0xf]
        %v444 = vld [vmem:[%s331 + $0x78] sm:$0xf]
        %v445 = vld [vmem:[%s331 + $0x7c] sm:$0xf]
        %v446 = vld [vmem:[%s331 + $0x80] sm:$0xf]
        %v447 = vld [vmem:[%s331 + $0x84] sm:$0xf]
        %v448 = vld [vmem:[%s331 + $0x88] sm:$0xf]
        %v449 = vld [vmem:[%s331 + $0x8c] sm:$0xf]
        %v450 = vld [vmem:[%s331 + $0x90] sm:$0xf]
        %v451 = vld [vmem:[%s331 + $0x94] sm:$0xf]
        %v452 = vld [vmem:[%s331 + $0x98] sm:$0xf]
        %v453 = vld [vmem:[%s331 + $0x9c] sm:$0xf]
        %v454 = vld [vmem:[%s331 + $0xa0] sm:$0xf]
        %v455 = vld [vmem:[%s331 + $0xa4] sm:$0xf]
        %v456 = vld [vmem:[%s331 + $0xa8] sm:$0xf]
        %v457 = vld [vmem:[%s331 + $0xac] sm:$0xf]
        %v458 = vld [vmem:[%s331 + $0xb0] sm:$0xf]
        %v459 = vld [vmem:[%s331 + $0xb4] sm:$0xf]
        %v460 = vld [vmem:[%s331 + $0xb8] sm:$0xf]
        %v461 = vld [vmem:[%s331 + $0xbc] sm:$0xf]
        %v494 = vunpack.c.l.b16 %v382
        %v495 = vunpack.c.h.b16 %v382
        %v496 = vunpack.c.l.b16 %v383
        %v497 = vunpack.c.l.b16 %v384
        %v498 = vunpack.c.h.b16 %v384
        %v499 = vunpack.c.l.b16 %v385
        %v500 = vunpack.c.l.b16 %v386
        %v501 = vunpack.c.h.b16 %v386
        %v502 = vunpack.c.l.b16 %v387
        %v503 = vunpack.c.l.b16 %v388
        %v504 = vunpack.c.h.b16 %v388
        %v505 = vunpack.c.l.b16 %v389
        %v506 = vunpack.c.l.b16 %v390
        %v507 = vunpack.c.h.b16 %v390
        %v508 = vunpack.c.l.b16 %v391
        %v509 = vunpack.c.l.b16 %v392
        %v510 = vunpack.c.h.b16 %v392
        %v511 = vunpack.c.l.b16 %v393
        %v512 = vunpack.c.l.b16 %v394
        %v513 = vunpack.c.h.b16 %v394
        %v514 = vunpack.c.l.b16 %v395
        %v515 = vunpack.c.l.b16 %v396
        %v516 = vunpack.c.h.b16 %v396
        %v517 = vunpack.c.l.b16 %v397
        %v518 = vunpack.c.l.b16 %v398
        %v519 = vunpack.c.h.b16 %v398
        %v520 = vunpack.c.l.b16 %v399
        %v521 = vunpack.c.l.b16 %v400
        %v522 = vunpack.c.h.b16 %v400
        %v523 = vunpack.c.l.b16 %v401
        %v524 = vunpack.c.l.b16 %v402
        %v525 = vunpack.c.h.b16 %v402
        %v526 = vunpack.c.l.b16 %v403
        %v527 = vunpack.c.l.b16 %v404
        %v528 = vunpack.c.h.b16 %v404
        %v529 = vunpack.c.l.b16 %v405
        %v530 = vunpack.c.l.b16 %v406
        %v531 = vunpack.c.h.b16 %v406
        %v532 = vunpack.c.l.b16 %v407
        %v533 = vunpack.c.l.b16 %v408
        %v534 = vunpack.c.h.b16 %v408
        %v535 = vunpack.c.l.b16 %v409
        %v536 = vunpack.c.l.b16 %v410
        %v537 = vunpack.c.h.b16 %v410
        %v538 = vunpack.c.l.b16 %v411
        %v539 = vunpack.c.l.b16 %v412
        %v540 = vunpack.c.h.b16 %v412
        %v541 = vunpack.c.l.b16 %v413
        %v542 = vpack.c.b16 %v497, %v494
        %v543 = vpack.c.b16 %v498, %v495
        %v544 = vpack.c.b16 %v499, %v496
        %v545 = vpack.c.b16 %v503, %v500
        %v546 = vpack.c.b16 %v504, %v501
        %v547 = vpack.c.b16 %v505, %v502
        %v548 = vpack.c.b16 %v509, %v506
        %v549 = vpack.c.b16 %v510, %v507
        %v550 = vpack.c.b16 %v511, %v508
        %v551 = vpack.c.b16 %v515, %v512
        %v552 = vpack.c.b16 %v516, %v513
        %v553 = vpack.c.b16 %v517, %v514
        %v554 = vpack.c.b16 %v521, %v518
        %v555 = vpack.c.b16 %v522, %v519
        %v556 = vpack.c.b16 %v523, %v520
        %v557 = vpack.c.b16 %v527, %v524
        %v558 = vpack.c.b16 %v528, %v525
        %v559 = vpack.c.b16 %v529, %v526
        %v560 = vpack.c.b16 %v533, %v530
        %v561 = vpack.c.b16 %v534, %v531
        %v562 = vpack.c.b16 %v535, %v532
        %v563 = vpack.c.b16 %v539, %v536
        %v564 = vpack.c.b16 %v540, %v537
        %v565 = vpack.c.b16 %v541, %v538
        %v638 = vunpack.c.l.b16 %v414
        %v639 = vunpack.c.l.b16 %v415
        %v640 = vunpack.c.l.b16 %v416
        %v641 = vunpack.c.l.b16 %v417
        %v642 = vunpack.c.l.b16 %v418
        %v643 = vunpack.c.l.b16 %v419
        %v644 = vunpack.c.l.b16 %v420
        %v645 = vunpack.c.l.b16 %v421
        %v646 = vunpack.c.l.b16 %v422
        %v647 = vunpack.c.l.b16 %v423
        %v648 = vunpack.c.l.b16 %v424
        %v649 = vunpack.c.l.b16 %v425
        %v650 = vunpack.c.l.b16 %v426
        %v651 = vunpack.c.l.b16 %v427
        %v652 = vunpack.c.l.b16 %v428
        %v653 = vunpack.c.l.b16 %v429
        %v654 = vunpack.c.l.b16 %v430
        %v655 = vunpack.c.l.b16 %v431
        %v656 = vunpack.c.l.b16 %v432
        %v657 = vunpack.c.l.b16 %v433
        %v658 = vunpack.c.l.b16 %v434
        %v659 = vunpack.c.l.b16 %v435
        %v660 = vunpack.c.l.b16 %v436
        %v661 = vunpack.c.l.b16 %v437
        %v662 = vunpack.c.l.b16 %v438
        %v663 = vunpack.c.l.b16 %v439
        %v664 = vunpack.c.l.b16 %v440
        %v665 = vunpack.c.l.b16 %v441
        %v666 = vunpack.c.l.b16 %v442
        %v667 = vunpack.c.l.b16 %v443
        %v668 = vunpack.c.l.b16 %v444
        %v669 = vunpack.c.l.b16 %v445
        %v670 = vunpack.c.l.b16 %v446
        %v671 = vunpack.c.l.b16 %v447
        %v672 = vunpack.c.l.b16 %v448
        %v673 = vunpack.c.l.b16 %v449
        %v674 = vunpack.c.l.b16 %v450
        %v675 = vunpack.c.l.b16 %v451
        %v676 = vunpack.c.l.b16 %v452
        %v677 = vunpack.c.l.b16 %v453
        %v678 = vunpack.c.l.b16 %v454
        %v679 = vunpack.c.l.b16 %v455
        %v680 = vunpack.c.l.b16 %v456
        %v681 = vunpack.c.l.b16 %v457
        %v682 = vunpack.c.l.b16 %v458
        %v683 = vunpack.c.l.b16 %v459
        %v684 = vunpack.c.l.b16 %v460
        %v685 = vunpack.c.l.b16 %v461
        %v686 = vpack.c.b16 %v639, %v638
        %v687 = vpack.c.b16 %v641, %v640
        %v688 = vpack.c.b16 %v643, %v642
        %v689 = vpack.c.b16 %v645, %v644
        %v690 = vpack.c.b16 %v647, %v646
        %v691 = vpack.c.b16 %v649, %v648
        %v692 = vpack.c.b16 %v651, %v650
        %v693 = vpack.c.b16 %v653, %v652
        %v694 = vpack.c.b16 %v655, %v654
        %v695 = vpack.c.b16 %v657, %v656
        %v696 = vpack.c.b16 %v659, %v658
        %v697 = vpack.c.b16 %v661, %v660
        %v698 = vpack.c.b16 %v663, %v662
        %v699 = vpack.c.b16 %v665, %v664
        %v700 = vpack.c.b16 %v667, %v666
        %v701 = vpack.c.b16 %v669, %v668
        %v702 = vpack.c.b16 %v671, %v670
        %v703 = vpack.c.b16 %v673, %v672
        %v704 = vpack.c.b16 %v675, %v674
        %v705 = vpack.c.b16 %v677, %v676
        %v706 = vpack.c.b16 %v679, %v678
        %v707 = vpack.c.b16 %v681, %v680
        %v708 = vpack.c.b16 %v683, %v682
        %v709 = vpack.c.b16 %v685, %v684
        %734 = vmatprep.subr.bf16.mxu0 0
        %735 = vmatpush1.bf16.msra.mxu0 %v693
        %736 = vmatprep.subr.bf16.mxu0 0
        %737 = vmatpush1.bf16.msra.mxu0 %v692
        %738 = vmatprep.subr.bf16.mxu0 0
        %739 = vmatpush1.bf16.msra.mxu0 %v691
        %740 = vmatprep.subr.bf16.mxu0 0
        %741 = vmatpush1.bf16.msra.mxu0 %v690
        %742 = vmatprep.subr.bf16.mxu0 0
        %743 = vmatpush1.bf16.msra.mxu0 %v689
        %744 = vmatprep.subr.bf16.mxu0 0
        %745 = vmatpush1.bf16.msra.mxu0 %v688
        %746 = vmatprep.subr.bf16.mxu0 0
        %747 = vmatpush1.bf16.msra.mxu0 %v687
        %748 = vmatprep.subr.bf16.mxu0 0
        %749 = vmatpush1.bf16.msra.mxu0 %v686
        %750 = vmatprep.subr.bf16.mxu0 0
        %751 = vmatpush2.bf16.msra.mxu0 %v701
        %752 = vmatprep.subr.bf16.mxu0 0
        %753 = vmatpush2.bf16.msra.mxu0 %v700
        %754 = vmatprep.subr.bf16.mxu0 0
        %755 = vmatpush2.bf16.msra.mxu0 %v699
        %756 = vmatprep.subr.bf16.mxu0 0
        %757 = vmatpush2.bf16.msra.mxu0 %v698
        %758 = vmatprep.subr.bf16.mxu0 0
        %759 = vmatpush2.bf16.msra.mxu0 %v697
        %760 = vmatprep.subr.bf16.mxu0 0
        %761 = vmatpush2.bf16.msra.mxu0 %v696
        %762 = vmatprep.subr.bf16.mxu0 0
        %763 = vmatpush2.bf16.msra.mxu0 %v695
        %764 = vmatprep.subr.bf16.mxu0 0
        %765 = vmatpush2.bf16.msra.mxu0 %v694
        %766 = vmatprep.mubr.bf16.mxu0 %v543
        %767 = vmatmul.mubr.bf16.gmra.mxu0 %v542
        %v768 = vpop.f32.mrf.mxu0
        %v769 = vadd.f32 0.0, %v768
        %v770 = vpop.f32.mrf.mxu0
        %v771 = vpop.f32.mrf.mxu0
        %v772 = vadd.f32 0.0, %v771
        %v773 = vpop.f32.mrf.mxu0
        %774 = vmatprep.mubr.bf16.mxu0 %v546
        %775 = vmatmul.mubr.bf16.gmra.mxu0 %v545
        %v776 = vpop.f32.mrf.mxu0
        %v777 = vadd.f32 0.0, %v776
        %v778 = vpop.f32.mrf.mxu0
        %v779 = vpop.f32.mrf.mxu0
        %v780 = vadd.f32 0.0, %v779
        %v781 = vpop.f32.mrf.mxu0
        %782 = vmatprep.mubr.bf16.mxu0 %v549
        %783 = vmatmul.mubr.bf16.gmra.mxu0 %v548
        %v784 = vpop.f32.mrf.mxu0
        %v785 = vadd.f32 0.0, %v784
        %v786 = vpop.f32.mrf.mxu0
        %v787 = vpop.f32.mrf.mxu0
        %v788 = vadd.f32 0.0, %v787
        %v789 = vpop.f32.mrf.mxu0
        %790 = vmatprep.mubr.bf16.mxu0 %v552
        %791 = vmatmul.mubr.bf16.gmra.mxu0 %v551
        %v792 = vpop.f32.mrf.mxu0
        %v793 = vadd.f32 0.0, %v792
        %v794 = vpop.f32.mrf.mxu0
        %v795 = vpop.f32.mrf.mxu0
        %v796 = vadd.f32 0.0, %v795
        %v797 = vpop.f32.mrf.mxu0
        %798 = vmatprep.mubr.bf16.mxu0 %v555
        %799 = vmatmul.mubr.bf16.gmra.mxu0 %v554
        %v800 = vpop.f32.mrf.mxu0
        %v801 = vadd.f32 0.0, %v800
        %v802 = vpop.f32.mrf.mxu0
        %v803 = vpop.f32.mrf.mxu0
        %v804 = vadd.f32 0.0, %v803
        %v805 = vpop.f32.mrf.mxu0
        %806 = vmatprep.mubr.bf16.mxu0 %v558
        %807 = vmatmul.mubr.bf16.gmra.mxu0 %v557
        %v808 = vpop.f32.mrf.mxu0
        %v809 = vadd.f32 0.0, %v808
        %v810 = vpop.f32.mrf.mxu0
        %v811 = vpop.f32.mrf.mxu0
        %v812 = vadd.f32 0.0, %v811
        %v813 = vpop.f32.mrf.mxu0
        %814 = vmatprep.mubr.bf16.mxu0 %v561
        %815 = vmatmul.mubr.bf16.gmra.mxu0 %v560
        %v816 = vpop.f32.mrf.mxu0
        %v817 = vadd.f32 0.0, %v816
        %v818 = vpop.f32.mrf.mxu0
        %v819 = vpop.f32.mrf.mxu0
        %v820 = vadd.f32 0.0, %v819
        %v821 = vpop.f32.mrf.mxu0
        %822 = vmatprep.mubr.bf16.mxu0 %v564
        %823 = vmatmul.mubr.bf16.gmra.mxu0 %v563
        %v824 = vpop.f32.mrf.mxu0
        %v825 = vadd.f32 0.0, %v824
        %v826 = vpop.f32.mrf.mxu0
        %v827 = vpop.f32.mrf.mxu0
        %v828 = vadd.f32 0.0, %v827
        %v829 = vpop.f32.mrf.mxu0
        %830 = vdwg.mxu0
        %831 = vmatprep.subr.bf16.mxu0 0
        %832 = vmatpush1.bf16.msra.mxu0 %v709
        %833 = vmatprep.subr.bf16.mxu0 0
        %834 = vmatpush1.bf16.msra.mxu0 %v708
        %835 = vmatprep.subr.bf16.mxu0 0
        %836 = vmatpush1.bf16.msra.mxu0 %v707
        %837 = vmatprep.subr.bf16.mxu0 0
        %838 = vmatpush1.bf16.msra.mxu0 %v706
        %839 = vmatprep.subr.bf16.mxu0 0
        %840 = vmatpush1.bf16.msra.mxu0 %v705
        %841 = vmatprep.subr.bf16.mxu0 0
        %842 = vmatpush1.bf16.msra.mxu0 %v704
        %843 = vmatprep.subr.bf16.mxu0 0
        %844 = vmatpush1.bf16.msra.mxu0 %v703
        %845 = vmatprep.subr.bf16.mxu0 0
        %846 = vmatpush1.bf16.msra.mxu0 %v702
        %847 = vmatprep.subr.bf16.mxu0 0
        %848 = vmatpush2.bf16.msra.mxu0 0
        %849 = vmatprep.subr.bf16.mxu0 0
        %850 = vmatpush2.bf16.msra.mxu0 0
        %851 = vmatprep.subr.bf16.mxu0 0
        %852 = vmatpush2.bf16.msra.mxu0 0
        %853 = vmatprep.subr.bf16.mxu0 0
        %854 = vmatpush2.bf16.msra.mxu0 0
        %855 = vmatprep.subr.bf16.mxu0 0
        %856 = vmatpush2.bf16.msra.mxu0 0
        %857 = vmatprep.subr.bf16.mxu0 0
        %858 = vmatpush2.bf16.msra.mxu0 0
        %859 = vmatprep.subr.bf16.mxu0 0
        %860 = vmatpush2.bf16.msra.mxu0 0
        %861 = vmatprep.subr.bf16.mxu0 0
        %862 = vmatpush2.bf16.msra.mxu0 0
        %863 = vmatprep.mubr.bf16.mxu0 0
        %864 = vmatmul.mubr.bf16.gmra.mxu0 %v544
        %v865 = vpop.f32.mrf.mxu0
        %v866 = vadd.f32 %v769, %v865
        %v867 = vpop.f32.mrf.mxu0
        %v868 = vpop.f32.mrf.mxu0
        %v869 = vadd.f32 %v772, %v868
        %v870 = vpop.f32.mrf.mxu0
        %871 = vmatprep.mubr.bf16.mxu0 0
        %872 = vmatmul.mubr.bf16.gmra.mxu0 %v547
        %v873 = vpop.f32.mrf.mxu0
        %v874 = vadd.f32 %v777, %v873
        %v875 = vpop.f32.mrf.mxu0
        %v876 = vpop.f32.mrf.mxu0
        %v877 = vadd.f32 %v780, %v876
        %v878 = vpop.f32.mrf.mxu0
        %879 = vmatprep.mubr.bf16.mxu0 0
        %880 = vmatmul.mubr.bf16.gmra.mxu0 %v550
        %v881 = vpop.f32.mrf.mxu0
        %v882 = vadd.f32 %v785, %v881
        %v883 = vpop.f32.mrf.mxu0
        %v884 = vpop.f32.mrf.mxu0
        %v885 = vadd.f32 %v788, %v884
        %v886 = vpop.f32.mrf.mxu0
        %887 = vmatprep.mubr.bf16.mxu0 0
        %888 = vmatmul.mubr.bf16.gmra.mxu0 %v553
        %v889 = vpop.f32.mrf.mxu0
        %v890 = vadd.f32 %v793, %v889
        %v891 = vpop.f32.mrf.mxu0
        %v892 = vpop.f32.mrf.mxu0
        %v893 = vadd.f32 %v796, %v892
        %v894 = vpop.f32.mrf.mxu0
        %895 = vmatprep.mubr.bf16.mxu0 0
        %896 = vmatmul.mubr.bf16.gmra.mxu0 %v556
        %v897 = vpop.f32.mrf.mxu0
        %v898 = vadd.f32 %v801, %v897
        %v899 = vpop.f32.mrf.mxu0
        %v900 = vpop.f32.mrf.mxu0
        %v901 = vadd.f32 %v804, %v900
        %v902 = vpop.f32.mrf.mxu0
        %903 = vmatprep.mubr.bf16.mxu0 0
        %904 = vmatmul.mubr.bf16.gmra.mxu0 %v559
        %v905 = vpop.f32.mrf.mxu0
        %v906 = vadd.f32 %v809, %v905
        %v907 = vpop.f32.mrf.mxu0
        %v908 = vpop.f32.mrf.mxu0
        %v909 = vadd.f32 %v812, %v908
        %v910 = vpop.f32.mrf.mxu0
        %911 = vmatprep.mubr.bf16.mxu0 0
        %912 = vmatmul.mubr.bf16.gmra.mxu0 %v562
        %v913 = vpop.f32.mrf.mxu0
        %v914 = vadd.f32 %v817, %v913
        %v915 = vpop.f32.mrf.mxu0
        %v916 = vpop.f32.mrf.mxu0
        %v917 = vadd.f32 %v820, %v916
        %v918 = vpop.f32.mrf.mxu0
        %919 = vmatprep.mubr.bf16.mxu0 0
        %920 = vmatmul.mubr.bf16.gmra.mxu0 %v565
        %v921 = vpop.f32.mrf.mxu0
        %v922 = vadd.f32 %v825, %v921
        %v923 = vpop.f32.mrf.mxu0
        %v924 = vpop.f32.mrf.mxu0
        %v925 = vadd.f32 %v828, %v924
        %v926 = vpop.f32.mrf.mxu0
        %927 = vdwg.mxu0
        %v928 = vadd.f32 %v366, %v866
        %v929 = vadd.f32 %v367, %v869
        %v930 = vadd.f32 %v368, %v874
        %v931 = vadd.f32 %v369, %v877
        %v932 = vadd.f32 %v370, %v882
        %v933 = vadd.f32 %v371, %v885
        %v934 = vadd.f32 %v372, %v890
        %v935 = vadd.f32 %v373, %v893
        %v936 = vadd.f32 %v374, %v898
        %v937 = vadd.f32 %v375, %v901
        %v938 = vadd.f32 %v376, %v906
        %v939 = vadd.f32 %v377, %v909
        %v940 = vadd.f32 %v378, %v914
        %v941 = vadd.f32 %v379, %v917
        %v942 = vadd.f32 %v380, %v922
        %v943 = vadd.f32 %v381, %v925
        %944 = vst [vmem:[#allocation2] sm:$0xff] %v928
        %945 = vst [vmem:[#allocation2 + $0x8] sm:$0xff] %v929
        %946 = vst [vmem:[#allocation2 + $0x10] sm:$0xff] %v930
        %947 = vst [vmem:[#allocation2 + $0x18] sm:$0xff] %v931
        %948 = vst [vmem:[#allocation2 + $0x20] sm:$0xff] %v932
        %949 = vst [vmem:[#allocation2 + $0x28] sm:$0xff] %v933
        %950 = vst [vmem:[#allocation2 + $0x30] sm:$0xff] %v934
        %951 = vst [vmem:[#allocation2 + $0x38] sm:$0xff] %v935
        %952 = vst [vmem:[#allocation2 + $0x40] sm:$0xff] %v936
        %953 = vst [vmem:[#allocation2 + $0x48] sm:$0xff] %v937
        %954 = vst [vmem:[#allocation2 + $0x50] sm:$0xff] %v938
        %955 = vst [vmem:[#allocation2 + $0x58] sm:$0xff] %v939
        %956 = vst [vmem:[#allocation2 + $0x60] sm:$0xff] %v940
        %957 = vst [vmem:[#allocation2 + $0x68] sm:$0xff] %v941
        %958 = vst [vmem:[#allocation2 + $0x70] sm:$0xff] %v942
        %959 = vst [vmem:[#allocation2 + $0x78] sm:$0xff] %v943
        %p960 = scmp.eq.s32.totalorder %s21, 2
        // Predicated region
        $region63: #{bottleneck_forward.5} parent=53 // pred_check
          %p961 = pneg %p960
        $region64: #{bottleneck_forward.5} parent=53 // pred_check_branch
          %963 = sbr.rel (%p961) target = $region66
        $region65: #{bottleneck_forward.5} parent=53 // pred_region
          %v964 = vld [vmem:[#allocation2] sm:$0xff]
          %v965 = vld [vmem:[#allocation2 + $0x8] sm:$0xff]
          %v966 = vld [vmem:[#allocation2 + $0x10] sm:$0xff]
          %v967 = vld [vmem:[#allocation2 + $0x18] sm:$0xff]
          %v968 = vld [vmem:[#allocation2 + $0x20] sm:$0xff]
          %v969 = vld [vmem:[#allocation2 + $0x28] sm:$0xff]
          %v970 = vld [vmem:[#allocation2 + $0x30] sm:$0xff]
          %v971 = vld [vmem:[#allocation2 + $0x38] sm:$0xff]
          %v972 = vld [vmem:[#allocation2 + $0x40] sm:$0xff]
          %v973 = vld [vmem:[#allocation2 + $0x48] sm:$0xff]
          %v974 = vld [vmem:[#allocation2 + $0x50] sm:$0xff]
          %v975 = vld [vmem:[#allocation2 + $0x58] sm:$0xff]
          %v976 = vld [vmem:[#allocation2 + $0x60] sm:$0xff]
          %v977 = vld [vmem:[#allocation2 + $0x68] sm:$0xff]
          %v978 = vld [vmem:[#allocation2 + $0x70] sm:$0xff]
          %v979 = vld [vmem:[#allocation2 + $0x78] sm:$0xff]
          %v980 = vld [vmem:[%s335] sm:$0x1]
          %v982 = vlaneseq
          %v983 = vshrl.u32 %v982, 7
          %v984 = vsub.s32 0, %v983
          %v985 = vrot.slane %v980, %v984
          %v987 = vadd.f32 %v964, %v985
          %v988 = vadd.f32 %v965, %v985
          %v989 = vadd.f32 %v966, %v985
          %v990 = vadd.f32 %v967, %v985
          %v991 = vadd.f32 %v968, %v985
          %v992 = vadd.f32 %v969, %v985
          %v993 = vadd.f32 %v970, %v985
          %v994 = vadd.f32 %v971, %v985
          %v995 = vadd.f32 %v972, %v985
          %v996 = vadd.f32 %v973, %v985
          %v997 = vadd.f32 %v974, %v985
          %v998 = vadd.f32 %v975, %v985
          %v999 = vadd.f32 %v976, %v985
          %v1000 = vadd.f32 %v977, %v985
          %v1001 = vadd.f32 %v978, %v985
          %v1002 = vadd.f32 %v979, %v985
          %v1003 = vmax.f32 %v987, 0.0
          %v1004 = vmax.f32 %v988, 0.0
          %v1005 = vmax.f32 %v989, 0.0
          %v1006 = vmax.f32 %v990, 0.0
          %v1007 = vmax.f32 %v991, 0.0
          %v1008 = vmax.f32 %v992, 0.0
          %v1009 = vmax.f32 %v993, 0.0
          %v1010 = vmax.f32 %v994, 0.0
          %v1011 = vmax.f32 %v995, 0.0
          %v1012 = vmax.f32 %v996, 0.0
          %v1013 = vmax.f32 %v997, 0.0
          %v1014 = vmax.f32 %v998, 0.0
          %v1015 = vmax.f32 %v999, 0.0
          %v1016 = vmax.f32 %v1000, 0.0
          %v1017 = vmax.f32 %v1001, 0.0
          %v1018 = vmax.f32 %v1002, 0.0
          %v1019 = vpack.c.bf16 %v1004, %v1003
          %v1020 = vpack.c.bf16 %v1006, %v1005
          %v1021 = vpack.c.bf16 %v1008, %v1007
          %v1022 = vpack.c.bf16 %v1010, %v1009
          %v1023 = vpack.c.bf16 %v1012, %v1011
          %v1024 = vpack.c.bf16 %v1014, %v1013
          %v1025 = vpack.c.bf16 %v1016, %v1015
          %v1026 = vpack.c.bf16 %v1018, %v1017
          %v1035 = vunpack.c.l.b16 %v1019
          %v1036 = vunpack.c.h.b16 %v1019
          %v1037 = vunpack.c.l.b16 %v1020
          %v1038 = vunpack.c.h.b16 %v1020
          %v1039 = vunpack.c.l.b16 %v1021
          %v1040 = vunpack.c.h.b16 %v1021
          %v1041 = vunpack.c.l.b16 %v1022
          %v1042 = vunpack.c.h.b16 %v1022
          %v1043 = vunpack.c.l.b16 %v1023
          %v1044 = vunpack.c.h.b16 %v1023
          %v1045 = vunpack.c.l.b16 %v1024
          %v1046 = vunpack.c.h.b16 %v1024
          %v1047 = vunpack.c.l.b16 %v1025
          %v1048 = vunpack.c.h.b16 %v1025
          %v1049 = vunpack.c.l.b16 %v1026
          %v1050 = vunpack.c.h.b16 %v1026
          %v1051 = vpack.c.b16 %v1035, %v1035
          %v1052 = vpack.c.b16 %v1036, %v1036
          %v1053 = vpack.c.b16 %v1037, %v1037
          %v1054 = vpack.c.b16 %v1038, %v1038
          %v1055 = vpack.c.b16 %v1039, %v1039
          %v1056 = vpack.c.b16 %v1040, %v1040
          %v1057 = vpack.c.b16 %v1041, %v1041
          %v1058 = vpack.c.b16 %v1042, %v1042
          %v1059 = vpack.c.b16 %v1043, %v1043
          %v1060 = vpack.c.b16 %v1044, %v1044
          %v1061 = vpack.c.b16 %v1045, %v1045
          %v1062 = vpack.c.b16 %v1046, %v1046
          %v1063 = vpack.c.b16 %v1047, %v1047
          %v1064 = vpack.c.b16 %v1048, %v1048
          %v1065 = vpack.c.b16 %v1049, %v1049
          %v1066 = vpack.c.b16 %v1050, %v1050
          %1083 = vst [vmem:[%s343] sm:$0xf] %v1051
          %1084 = vst [vmem:[%s343 + $0x4] sm:$0xf] %v1052
          %1085 = vst [vmem:[%s343 + $0x8] sm:$0xf] %v1053
          %1086 = vst [vmem:[%s343 + $0xc] sm:$0xf] %v1054
          %1087 = vst [vmem:[%s343 + $0x10] sm:$0xf] %v1055
          %1088 = vst [vmem:[%s343 + $0x14] sm:$0xf] %v1056
          %1089 = vst [vmem:[%s343 + $0x18] sm:$0xf] %v1057
          %1090 = vst [vmem:[%s343 + $0x1c] sm:$0xf] %v1058
          %1091 = vst [vmem:[%s343 + $0x20] sm:$0xf] %v1059
          %1092 = vst [vmem:[%s343 + $0x24] sm:$0xf] %v1060
          %1093 = vst [vmem:[%s343 + $0x28] sm:$0xf] %v1061
          %1094 = vst [vmem:[%s343 + $0x2c] sm:$0xf] %v1062
          %1095 = vst [vmem:[%s343 + $0x30] sm:$0xf] %v1063
          %1096 = vst [vmem:[%s343 + $0x34] sm:$0xf] %v1064
          %1097 = vst [vmem:[%s343 + $0x38] sm:$0xf] %v1065
          %1098 = vst [vmem:[%s343 + $0x3c] sm:$0xf] %v1066
        $region66: #{bottleneck_forward.5} parent=53 // pred_fallthru
          _
        %s1099 = smul.u32 16, %s19
        %p1100 = scmp.lt.s32.totalorder %s1099, 15
        %s1101 = scalar_select %p1100, %s1099, 15
        %p1102 = scmp.lt.s32.totalorder %s20, 0
        %s1103 = scalar_select %p1102, %s20, 0
        %s1104 = sadd.s32 %s1103, %s1101
        %s1105 = smul.addr %s1104, 4
        %s1106 = scalar_lea.vmem %s3, %s1105
        // Predicated region
        $region67: #{bottleneck_forward.5} parent=53 // pred_check
          %p1107 = pneg %p135
        $region68: #{bottleneck_forward.5} parent=53 // pred_check_branch
          %1109 = sbr.rel (%p1107) target = $region70
        $region69: #{bottleneck_forward.5} parent=53 // pred_region
          %s1110 = smul.u32 16, %s19
        $region70: #{bottleneck_forward.5} parent=53 // pred_fallthru
          _
        // Predicated region
        $region71: #{bottleneck_forward.5} parent=53 // pred_check
          %p1111 = pneg %p135
        $region72: #{bottleneck_forward.5} parent=53 // pred_check_branch
          %1113 = sbr.rel (%p1111) target = $region74
        $region73: #{bottleneck_forward.5} parent=53 // pred_region
          %s1114 = smul.u32 16, %s19
          %p1115 = scmp.lt.s32.totalorder %s1114, 15
          %s1116 = scalar_select %p1115, %s1114, 15
          %p1117 = scmp.lt.s32.totalorder %s20, 0
          %s1118 = scalar_select %p1117, %s20, 0
          %s1119 = sadd.s32 %s1118, %s1116
          %s1120 = smul.addr %s1119, 4
          %s1121 = scalar_lea.vmem %s3, %s1120
        $region74: #{bottleneck_forward.5} parent=53 // pred_fallthru
          _
      $region54: #{bottleneck_forward.5} parent=5 // pred_fallthru
        _
      %p1122 = scmp.le.s32.totalorder 2, %s9
      // Predicated region
      $region75: #{bottleneck_forward.5} parent=5 // pred_check
        %p1123 = pneg %p1122
      $region76: #{bottleneck_forward.5} parent=5 // pred_check_branch
        %1125 = sbr.rel (%p1123) target = $region78
      $region77: #{bottleneck_forward.5} parent=5 // pred_region
        %s1126 = ssub.s32 %s9, 2
      $region78: #{bottleneck_forward.5} parent=5 // pred_fallthru
        _
    $region6: #{bottleneck_forward.5} parent=1 // loop_footer
      %s13 = sadd.s32 1, %s9
    $region7: #{bottleneck_forward.5} parent=1 // loop_footer_branch
      %8 = sbr.rel target = $region3
    $region8: #{bottleneck_forward.5} parent=1 // loop_exit
      _

// kernel: bottleneck_forward.6
$region0: #{bottleneck_forward.6}
  #allocation0 [shape = 'u32[]', space=smem, size = 0x4, offset = 0x4, fixed_abs, tag = 'smem constant byte address 0x4 - core index']
  #allocation1 [shape = 'u32[144,128]{1,0:T(1,128)}', space=vmem, size = 0x12000, scoped, tag = 'internal scratch']
  %s0 = inlined_call_operand.vmem [shape: bf16[128,4], index: 0, kind: input, shape index: {}]
  %s1 = inlined_call_operand.vmem [shape: bf16[4,128], index: 1, kind: input, shape index: {}]
  %s2 = inlined_call_operand.vmem [shape: f32[1,128], index: 2, kind: input, shape index: {}]
  %s3 = inlined_call_operand.vmem [shape: bf16[128,128], index: 3, kind: output, shape index: {}]
  %s4 = sld [smem:[#allocation0]]
  $region22: #{bottleneck_forward.6} parent=0
    _
  %s6 = ssub.s32 1, %s4
  %s7 = scalar_select 0, %s6, %s4
  // Predicated region
  $region2: #{bottleneck_forward.6} parent=0 // pred_check
    _
  $region3: #{bottleneck_forward.6} parent=0 // pred_check_branch
    %9 = sbr.rel (0) target = $region5
  $region4: #{bottleneck_forward.6} parent=0 // pred_region
    _
  $region5: #{bottleneck_forward.6} parent=0 // pred_fallthru
    _
  // Predicated region
  $region6: #{bottleneck_forward.6} parent=0 // pred_check
    _
  $region7: #{bottleneck_forward.6} parent=0 // pred_check_branch
    %11 = sbr.rel (0) target = $region9
  $region8: #{bottleneck_forward.6} parent=0 // pred_region
    _
  $region9: #{bottleneck_forward.6} parent=0 // pred_fallthru
    _
  // Predicated region
  $region10: #{bottleneck_forward.6} parent=0 // pred_check
    _
  $region11: #{bottleneck_forward.6} parent=0 // pred_check_branch
    %13 = sbr.rel (0) target = $region13
  $region12: #{bottleneck_forward.6} parent=0 // pred_region
    _
  $region13: #{bottleneck_forward.6} parent=0 // pred_fallthru
    _
  %v15 = vld [vmem:[%s0] sm:$0xf]
  %v16 = vld [vmem:[%s0 + $0x4] sm:$0xf]
  %v17 = vld [vmem:[%s0 + $0x8] sm:$0xf]
  %v18 = vld [vmem:[%s0 + $0xc] sm:$0xf]
  %v19 = vld [vmem:[%s0 + $0x10] sm:$0xf]
  %v20 = vld [vmem:[%s0 + $0x14] sm:$0xf]
  %v21 = vld [vmem:[%s0 + $0x18] sm:$0xf]
  %v22 = vld [vmem:[%s0 + $0x1c] sm:$0xf]
  %v23 = vld [vmem:[%s0 + $0x20] sm:$0xf]
  %v24 = vld [vmem:[%s0 + $0x24] sm:$0xf]
  %v25 = vld [vmem:[%s0 + $0x28] sm:$0xf]
  %v26 = vld [vmem:[%s0 + $0x2c] sm:$0xf]
  %v27 = vld [vmem:[%s0 + $0x30] sm:$0xf]
  %v28 = vld [vmem:[%s0 + $0x34] sm:$0xf]
  %v29 = vld [vmem:[%s0 + $0x38] sm:$0xf]
  %v30 = vld [vmem:[%s0 + $0x3c] sm:$0xf]
  %v31 = vld [vmem:[%s1] sm:$0x3]
  %v32 = vld [vmem:[%s2] sm:$0x1]
  %v34 = vlaneseq
  %v35 = vshrl.u32 %v34, 7
  %v36 = vsub.s32 0, %v35
  %v37 = vrot.slane %v32, %v36
  %v55 = vunpack.c.l.b16 %v15
  %v56 = vunpack.c.l.b16 %v16
  %v57 = vunpack.c.l.b16 %v17
  %v58 = vunpack.c.l.b16 %v18
  %v59 = vunpack.c.l.b16 %v19
  %v60 = vunpack.c.l.b16 %v20
  %v61 = vunpack.c.l.b16 %v21
  %v62 = vunpack.c.l.b16 %v22
  %v63 = vunpack.c.l.b16 %v23
  %v64 = vunpack.c.l.b16 %v24
  %v65 = vunpack.c.l.b16 %v25
  %v66 = vunpack.c.l.b16 %v26
  %v67 = vunpack.c.l.b16 %v27
  %v68 = vunpack.c.l.b16 %v28
  %v69 = vunpack.c.l.b16 %v29
  %v70 = vunpack.c.l.b16 %v30
  %v71 = vpack.c.b16 %v56, %v55
  %v72 = vpack.c.b16 %v58, %v57
  %v73 = vpack.c.b16 %v60, %v59
  %v74 = vpack.c.b16 %v62, %v61
  %v75 = vpack.c.b16 %v64, %v63
  %v76 = vpack.c.b16 %v66, %v65
  %v77 = vpack.c.b16 %v68, %v67
  %v78 = vpack.c.b16 %v70, %v69
  %vm79 = vcmask 31744
  %v81 = vsel %vm79, %v71, 0
  %v84 = vsel %vm79, %v72, 0
  %v87 = vsel %vm79, %v73, 0
  %v90 = vsel %vm79, %v74, 0
  %v93 = vsel %vm79, %v75, 0
  %v96 = vsel %vm79, %v76, 0
  %v99 = vsel %vm79, %v77, 0
  %v102 = vsel %vm79, %v78, 0
  %vm104 = vcmask 1041408
  %v106 = vsel %vm104, %v31, 0
  %108 = vmatprep.subr.bf16.mxu0 0
  %109 = vmatpush1.bf16.msra.mxu0 0
  %110 = vmatprep.subr.bf16.mxu0 0
  %111 = vmatpush1.bf16.msra.mxu0 0
  %112 = vmatprep.subr.bf16.mxu0 0
  %113 = vmatpush1.bf16.msra.mxu0 0
  %114 = vmatprep.subr.bf16.mxu0 0
  %115 = vmatpush1.bf16.msra.mxu0 0
  %116 = vmatprep.subr.bf16.mxu0 0
  %117 = vmatpush1.bf16.msra.mxu0 0
  %118 = vmatprep.subr.bf16.mxu0 0
  %119 = vmatpush1.bf16.msra.mxu0 0
  %120 = vmatprep.subr.bf16.mxu0 0
  %121 = vmatpush1.bf16.msra.mxu0 0
  %122 = vmatprep.subr.bf16.mxu0 0
  %123 = vmatpush1.bf16.msra.mxu0 %v106
  %124 = vmatprep.subr.bf16.mxu0 0
  %125 = vmatpush2.bf16.msra.mxu0 0
  %126 = vmatprep.subr.bf16.mxu0 0
  %127 = vmatpush2.bf16.msra.mxu0 0
  %128 = vmatprep.subr.bf16.mxu0 0
  %129 = vmatpush2.bf16.msra.mxu0 0
  %130 = vmatprep.subr.bf16.mxu0 0
  %131 = vmatpush2.bf16.msra.mxu0 0
  %132 = vmatprep.subr.bf16.mxu0 0
  %133 = vmatpush2.bf16.msra.mxu0 0
  %134 = vmatprep.subr.bf16.mxu0 0
  %135 = vmatpush2.bf16.msra.mxu0 0
  %136 = vmatprep.subr.bf16.mxu0 0
  %137 = vmatpush2.bf16.msra.mxu0 0
  %138 = vmatprep.subr.bf16.mxu0 0
  %139 = vmatpush2.bf16.msra.mxu0 0
  %140 = vmatprep.mubr.bf16.mxu0 0
  %141 = vmatmul.mubr.bf16.gmra.mxu0 %v81
  %v142 = vpop.f32.mrf.mxu0
  %v143 = vadd.f32 %v37, %v142
  %v144 = vpop.f32.mrf.mxu0
  %v145 = vpop.f32.mrf.mxu0
  %v146 = vadd.f32 %v37, %v145
  %v147 = vpop.f32.mrf.mxu0
  %148 = vmatprep.mubr.bf16.mxu0 0
  %149 = vmatmul.mubr.bf16.gmra.mxu0 %v84
  %v150 = vpop.f32.mrf.mxu0
  %v151 = vadd.f32 %v37, %v150
  %v152 = vpop.f32.mrf.mxu0
  %v153 = vpop.f32.mrf.mxu0
  %v154 = vadd.f32 %v37, %v153
  %v155 = vpop.f32.mrf.mxu0
  %156 = vmatprep.mubr.bf16.mxu0 0
  %157 = vmatmul.mubr.bf16.gmra.mxu0 %v87
  %v158 = vpop.f32.mrf.mxu0
  %v159 = vadd.f32 %v37, %v158
  %v160 = vpop.f32.mrf.mxu0
  %v161 = vpop.f32.mrf.mxu0
  %v162 = vadd.f32 %v37, %v161
  %v163 = vpop.f32.mrf.mxu0
  %164 = vmatprep.mubr.bf16.mxu0 0
  %165 = vmatmul.mubr.bf16.gmra.mxu0 %v90
  %v166 = vpop.f32.mrf.mxu0
  %v167 = vadd.f32 %v37, %v166
  %v168 = vpop.f32.mrf.mxu0
  %v169 = vpop.f32.mrf.mxu0
  %v170 = vadd.f32 %v37, %v169
  %v171 = vpop.f32.mrf.mxu0
  %172 = vmatprep.mubr.bf16.mxu0 0
  %173 = vmatmul.mubr.bf16.gmra.mxu0 %v93
  %v174 = vpop.f32.mrf.mxu0
  %v175 = vadd.f32 %v37, %v174
  %v176 = vpop.f32.mrf.mxu0
  %v177 = vpop.f32.mrf.mxu0
  %v178 = vadd.f32 %v37, %v177
  %v179 = vpop.f32.mrf.mxu0
  %180 = vmatprep.mubr.bf16.mxu0 0
  %181 = vmatmul.mubr.bf16.gmra.mxu0 %v96
  %v182 = vpop.f32.mrf.mxu0
  %v183 = vadd.f32 %v37, %v182
  %v184 = vpop.f32.mrf.mxu0
  %v185 = vpop.f32.mrf.mxu0
  %v186 = vadd.f32 %v37, %v185
  %v187 = vpop.f32.mrf.mxu0
  %188 = vmatprep.mubr.bf16.mxu0 0
  %189 = vmatmul.mubr.bf16.gmra.mxu0 %v99
  %v190 = vpop.f32.mrf.mxu0
  %v191 = vadd.f32 %v37, %v190
  %v192 = vpop.f32.mrf.mxu0
  %v193 = vpop.f32.mrf.mxu0
  %v194 = vadd.f32 %v37, %v193
  %v195 = vpop.f32.mrf.mxu0
  %196 = vmatprep.mubr.bf16.mxu0 0
  %197 = vmatmul.mubr.bf16.gmra.mxu0 %v102
  %v198 = vpop.f32.mrf.mxu0
  %v199 = vadd.f32 %v37, %v198
  %v200 = vpop.f32.mrf.mxu0
  %v201 = vpop.f32.mrf.mxu0
  %v202 = vadd.f32 %v37, %v201
  %v203 = vpop.f32.mrf.mxu0
  %204 = vdwg.mxu0
  %v205 = vpack.c.bf16 %v146, %v143
  %v206 = vpack.c.bf16 %v154, %v151
  %v207 = vpack.c.bf16 %v162, %v159
  %v208 = vpack.c.bf16 %v170, %v167
  %v209 = vpack.c.bf16 %v178, %v175
  %v210 = vpack.c.bf16 %v186, %v183
  %v211 = vpack.c.bf16 %v194, %v191
  %v212 = vpack.c.bf16 %v202, %v199
  %v221 = vunpack.c.l.b16 %v205
  %v222 = vunpack.c.h.b16 %v205
  %v223 = vunpack.c.l.b16 %v206
  %v224 = vunpack.c.h.b16 %v206
  %v225 = vunpack.c.l.b16 %v207
  %v226 = vunpack.c.h.b16 %v207
  %v227 = vunpack.c.l.b16 %v208
  %v228 = vunpack.c.h.b16 %v208
  %v229 = vunpack.c.l.b16 %v209
  %v230 = vunpack.c.h.b16 %v209
  %v231 = vunpack.c.l.b16 %v210
  %v232 = vunpack.c.h.b16 %v210
  %v233 = vunpack.c.l.b16 %v211
  %v234 = vunpack.c.h.b16 %v211
  %v235 = vunpack.c.l.b16 %v212
  %v236 = vunpack.c.h.b16 %v212
  %v237 = vpack.c.b16 %v221, %v221
  %v238 = vpack.c.b16 %v222, %v222
  %v239 = vpack.c.b16 %v223, %v223
  %v240 = vpack.c.b16 %v224, %v224
  %v241 = vpack.c.b16 %v225, %v225
  %v242 = vpack.c.b16 %v226, %v226
  %v243 = vpack.c.b16 %v227, %v227
  %v244 = vpack.c.b16 %v228, %v228
  %v245 = vpack.c.b16 %v229, %v229
  %v246 = vpack.c.b16 %v230, %v230
  %v247 = vpack.c.b16 %v231, %v231
  %v248 = vpack.c.b16 %v232, %v232
  %v249 = vpack.c.b16 %v233, %v233
  %v250 = vpack.c.b16 %v234, %v234
  %v251 = vpack.c.b16 %v235, %v235
  %v252 = vpack.c.b16 %v236, %v236
  %269 = vst [vmem:[%s3] sm:$0xf] %v237
  %270 = vst [vmem:[%s3 + $0x4] sm:$0xf] %v238
  %271 = vst [vmem:[%s3 + $0x8] sm:$0xf] %v239
  %272 = vst [vmem:[%s3 + $0xc] sm:$0xf] %v240
  %273 = vst [vmem:[%s3 + $0x10] sm:$0xf] %v241
  %274 = vst [vmem:[%s3 + $0x14] sm:$0xf] %v242
  %275 = vst [vmem:[%s3 + $0x18] sm:$0xf] %v243
  %276 = vst [vmem:[%s3 + $0x1c] sm:$0xf] %v244
  %277 = vst [vmem:[%s3 + $0x20] sm:$0xf] %v245
  %278 = vst [vmem:[%s3 + $0x24] sm:$0xf] %v246
  %279 = vst [vmem:[%s3 + $0x28] sm:$0xf] %v247
  %280 = vst [vmem:[%s3 + $0x2c] sm:$0xf] %v248
  %281 = vst [vmem:[%s3 + $0x30] sm:$0xf] %v249
  %282 = vst [vmem:[%s3 + $0x34] sm:$0xf] %v250
  %283 = vst [vmem:[%s3 + $0x38] sm:$0xf] %v251
  %284 = vst [vmem:[%s3 + $0x3c] sm:$0xf] %v252
  // Predicated region
  $region14: #{bottleneck_forward.6} parent=0 // pred_check
    _
  $region15: #{bottleneck_forward.6} parent=0 // pred_check_branch
    %286 = sbr.rel (0) target = $region17
  $region16: #{bottleneck_forward.6} parent=0 // pred_region
    _
  $region17: #{bottleneck_forward.6} parent=0 // pred_fallthru
    _
  // Predicated region
  $region18: #{bottleneck_forward.6} parent=0 // pred_check
    _
  $region19: #{bottleneck_forward.6} parent=0 // pred_check_branch
    %288 = sbr.rel (0) target = $region21
  $region20: #{bottleneck_forward.6} parent=0 // pred_region
    _
  $region21: #{bottleneck_forward.6} parent=0 // pred_fallthru
    _

// kernel: bottleneck_forward.7
$region0: #{bottleneck_forward.7}
  #allocation0 [shape = 'u32[]', space=smem, size = 0x4, offset = 0x4, fixed_abs, tag = 'smem constant byte address 0x4 - core index']
  #allocation1 [shape = 'u32[144,128]{1,0:T(1,128)}', space=vmem, size = 0x12000, scoped, tag = 'internal scratch']
  %s0 = inlined_call_operand.vmem [shape: bf16[128,128], index: 0, kind: input, shape index: {}]
  %s1 = inlined_call_operand.vmem [shape: bf16[128,128], index: 1, kind: input, shape index: {}]
  %s2 = inlined_call_operand.vmem [shape: f32[1,128], index: 2, kind: input, shape index: {}]
  %s3 = inlined_call_operand.vmem [shape: bf16[128,128], index: 3, kind: input, shape index: {}]
  %s4 = inlined_call_operand.hbm [shape: f32[128,128], index: 4, kind: output, shape index: {}]
  %s5 = sld [smem:[#allocation0]]
  $region26: #{bottleneck_forward.7} parent=0
    _
  %s7 = ssub.s32 1, %s5
  %s8 = scalar_select 0, %s7, %s5
  $region1: #{bottleneck_forward.7} parent=0
    #allocation2 [shape = 'u8[65536]{0}', space=vmem, size = 0x10000, scoped, tag = 'output window, operand 0, single buffered']
    #allocation3 [shape = 's32[1]{0}', space=sflag, size = 0x4, scoped, tag = 'scoped memory for bottleneck_forward.7']
    %9 = vsyncpa [#allocation3], 0
    // Predicated region
    $region2: #{bottleneck_forward.7} parent=1 // pred_check
      _
    $region3: #{bottleneck_forward.7} parent=1 // pred_check_branch
      %11 = sbr.rel (0) target = $region5
    $region4: #{bottleneck_forward.7} parent=1 // pred_region
      _
    $region5: #{bottleneck_forward.7} parent=1 // pred_fallthru
      _
    // Predicated region
    $region6: #{bottleneck_forward.7} parent=1 // pred_check
      _
    $region7: #{bottleneck_forward.7} parent=1 // pred_check_branch
      %13 = sbr.rel (0) target = $region9
    $region8: #{bottleneck_forward.7} parent=1 // pred_region
      _
    $region9: #{bottleneck_forward.7} parent=1 // pred_fallthru
      _
    // Predicated region
    $region10: #{bottleneck_forward.7} parent=1 // pred_check
      _
    $region11: #{bottleneck_forward.7} parent=1 // pred_check_branch
      %15 = sbr.rel (0) target = $region13
    $region12: #{bottleneck_forward.7} parent=1 // pred_region
      _
    $region13: #{bottleneck_forward.7} parent=1 // pred_fallthru
      _
    // Predicated region
    $region14: #{bottleneck_forward.7} parent=1 // pred_check
      _
    $region15: #{bottleneck_forward.7} parent=1 // pred_check_branch
      %17 = sbr.rel (0) target = $region17
    $region16: #{bottleneck_forward.7} parent=1 // pred_region
      _
    $region17: #{bottleneck_forward.7} parent=1 // pred_fallthru
      _
    %v19 = vld [vmem:[%s0] sm:$0xf]
    %v20 = vld [vmem:[%s0 + $0x4] sm:$0xf]
    %v21 = vld [vmem:[%s0 + $0x8] sm:$0xf]
    %v22 = vld [vmem:[%s0 + $0xc] sm:$0xf]
    %v23 = vld [vmem:[%s0 + $0x10] sm:$0xf]
    %v24 = vld [vmem:[%s0 + $0x14] sm:$0xf]
    %v25 = vld [vmem:[%s0 + $0x18] sm:$0xf]
    %v26 = vld [vmem:[%s0 + $0x1c] sm:$0xf]
    %v27 = vld [vmem:[%s0 + $0x20] sm:$0xf]
    %v28 = vld [vmem:[%s0 + $0x24] sm:$0xf]
    %v29 = vld [vmem:[%s0 + $0x28] sm:$0xf]
    %v30 = vld [vmem:[%s0 + $0x2c] sm:$0xf]
    %v31 = vld [vmem:[%s0 + $0x30] sm:$0xf]
    %v32 = vld [vmem:[%s0 + $0x34] sm:$0xf]
    %v33 = vld [vmem:[%s0 + $0x38] sm:$0xf]
    %v34 = vld [vmem:[%s0 + $0x3c] sm:$0xf]
    %v35 = vld [vmem:[%s1] sm:$0xf]
    %v36 = vld [vmem:[%s1 + $0x4] sm:$0xf]
    %v37 = vld [vmem:[%s1 + $0x8] sm:$0xf]
    %v38 = vld [vmem:[%s1 + $0xc] sm:$0xf]
    %v39 = vld [vmem:[%s1 + $0x10] sm:$0xf]
    %v40 = vld [vmem:[%s1 + $0x14] sm:$0xf]
    %v41 = vld [vmem:[%s1 + $0x18] sm:$0xf]
    %v42 = vld [vmem:[%s1 + $0x1c] sm:$0xf]
    %v43 = vld [vmem:[%s1 + $0x20] sm:$0xf]
    %v44 = vld [vmem:[%s1 + $0x24] sm:$0xf]
    %v45 = vld [vmem:[%s1 + $0x28] sm:$0xf]
    %v46 = vld [vmem:[%s1 + $0x2c] sm:$0xf]
    %v47 = vld [vmem:[%s1 + $0x30] sm:$0xf]
    %v48 = vld [vmem:[%s1 + $0x34] sm:$0xf]
    %v49 = vld [vmem:[%s1 + $0x38] sm:$0xf]
    %v50 = vld [vmem:[%s1 + $0x3c] sm:$0xf]
    %v51 = vld [vmem:[%s2] sm:$0x1]
    %v53 = vlaneseq
    %v54 = vshrl.u32 %v53, 7
    %v55 = vsub.s32 0, %v54
    %v56 = vrot.slane %v51, %v55
    %v74 = vunpack.c.l.b16 %v19
    %v75 = vunpack.c.l.b16 %v20
    %v76 = vunpack.c.l.b16 %v21
    %v77 = vunpack.c.l.b16 %v22
    %v78 = vunpack.c.l.b16 %v23
    %v79 = vunpack.c.l.b16 %v24
    %v80 = vunpack.c.l.b16 %v25
    %v81 = vunpack.c.l.b16 %v26
    %v82 = vunpack.c.l.b16 %v27
    %v83 = vunpack.c.l.b16 %v28
    %v84 = vunpack.c.l.b16 %v29
    %v85 = vunpack.c.l.b16 %v30
    %v86 = vunpack.c.l.b16 %v31
    %v87 = vunpack.c.l.b16 %v32
    %v88 = vunpack.c.l.b16 %v33
    %v89 = vunpack.c.l.b16 %v34
    %v90 = vpack.c.b16 %v75, %v74
    %v91 = vpack.c.b16 %v77, %v76
    %v92 = vpack.c.b16 %v79, %v78
    %v93 = vpack.c.b16 %v81, %v80
    %v94 = vpack.c.b16 %v83, %v82
    %v95 = vpack.c.b16 %v85, %v84
    %v96 = vpack.c.b16 %v87, %v86
    %v97 = vpack.c.b16 %v89, %v88
    %v122 = vunpack.c.l.b16 %v35
    %v123 = vunpack.c.l.b16 %v36
    %v124 = vunpack.c.l.b16 %v37
    %v125 = vunpack.c.l.b16 %v38
    %v126 = vunpack.c.l.b16 %v39
    %v127 = vunpack.c.l.b16 %v40
    %v128 = vunpack.c.l.b16 %v41
    %v129 = vunpack.c.l.b16 %v42
    %v130 = vunpack.c.l.b16 %v43
    %v131 = vunpack.c.l.b16 %v44
    %v132 = vunpack.c.l.b16 %v45
    %v133 = vunpack.c.l.b16 %v46
    %v134 = vunpack.c.l.b16 %v47
    %v135 = vunpack.c.l.b16 %v48
    %v136 = vunpack.c.l.b16 %v49
    %v137 = vunpack.c.l.b16 %v50
    %v138 = vpack.c.b16 %v123, %v122
    %v139 = vpack.c.b16 %v125, %v124
    %v140 = vpack.c.b16 %v127, %v126
    %v141 = vpack.c.b16 %v129, %v128
    %v142 = vpack.c.b16 %v131, %v130
    %v143 = vpack.c.b16 %v133, %v132
    %v144 = vpack.c.b16 %v135, %v134
    %v145 = vpack.c.b16 %v137, %v136
    %154 = vmatprep.subr.bf16.mxu0 0
    %155 = vmatpush1.bf16.msra.mxu0 %v145
    %156 = vmatprep.subr.bf16.mxu0 0
    %157 = vmatpush1.bf16.msra.mxu0 %v144
    %158 = vmatprep.subr.bf16.mxu0 0
    %159 = vmatpush1.bf16.msra.mxu0 %v143
    %160 = vmatprep.subr.bf16.mxu0 0
    %161 = vmatpush1.bf16.msra.mxu0 %v142
    %162 = vmatprep.subr.bf16.mxu0 0
    %163 = vmatpush1.bf16.msra.mxu0 %v141
    %164 = vmatprep.subr.bf16.mxu0 0
    %165 = vmatpush1.bf16.msra.mxu0 %v140
    %166 = vmatprep.subr.bf16.mxu0 0
    %167 = vmatpush1.bf16.msra.mxu0 %v139
    %168 = vmatprep.subr.bf16.mxu0 0
    %169 = vmatpush1.bf16.msra.mxu0 %v138
    %170 = vmatprep.subr.bf16.mxu0 0
    %171 = vmatpush2.bf16.msra.mxu0 0
    %172 = vmatprep.subr.bf16.mxu0 0
    %173 = vmatpush2.bf16.msra.mxu0 0
    %174 = vmatprep.subr.bf16.mxu0 0
    %175 = vmatpush2.bf16.msra.mxu0 0
    %176 = vmatprep.subr.bf16.mxu0 0
    %177 = vmatpush2.bf16.msra.mxu0 0
    %178 = vmatprep.subr.bf16.mxu0 0
    %179 = vmatpush2.bf16.msra.mxu0 0
    %180 = vmatprep.subr.bf16.mxu0 0
    %181 = vmatpush2.bf16.msra.mxu0 0
    %182 = vmatprep.subr.bf16.mxu0 0
    %183 = vmatpush2.bf16.msra.mxu0 0
    %184 = vmatprep.subr.bf16.mxu0 0
    %185 = vmatpush2.bf16.msra.mxu0 0
    %186 = vmatprep.mubr.bf16.mxu0 0
    %187 = vmatmul.mubr.bf16.gmra.mxu0 %v90
    %v188 = vpop.f32.mrf.mxu0
    %v189 = vadd.f32 %v56, %v188
    %v190 = vpop.f32.mrf.mxu0
    %v191 = vpop.f32.mrf.mxu0
    %v192 = vadd.f32 %v56, %v191
    %v193 = vpop.f32.mrf.mxu0
    %194 = vmatprep.mubr.bf16.mxu0 0
    %195 = vmatmul.mubr.bf16.gmra.mxu0 %v91
    %v196 = vpop.f32.mrf.mxu0
    %v197 = vadd.f32 %v56, %v196
    %v198 = vpop.f32.mrf.mxu0
    %v199 = vpop.f32.mrf.mxu0
    %v200 = vadd.f32 %v56, %v199
    %v201 = vpop.f32.mrf.mxu0
    %202 = vmatprep.mubr.bf16.mxu0 0
    %203 = vmatmul.mubr.bf16.gmra.mxu0 %v92
    %v204 = vpop.f32.mrf.mxu0
    %v205 = vadd.f32 %v56, %v204
    %v206 = vpop.f32.mrf.mxu0
    %v207 = vpop.f32.mrf.mxu0
    %v208 = vadd.f32 %v56, %v207
    %v209 = vpop.f32.mrf.mxu0
    %210 = vmatprep.mubr.bf16.mxu0 0
    %211 = vmatmul.mubr.bf16.gmra.mxu0 %v93
    %v212 = vpop.f32.mrf.mxu0
    %v213 = vadd.f32 %v56, %v212
    %v214 = vpop.f32.mrf.mxu0
    %v215 = vpop.f32.mrf.mxu0
    %v216 = vadd.f32 %v56, %v215
    %v217 = vpop.f32.mrf.mxu0
    %218 = vmatprep.mubr.bf16.mxu0 0
    %219 = vmatmul.mubr.bf16.gmra.mxu0 %v94
    %v220 = vpop.f32.mrf.mxu0
    %v221 = vadd.f32 %v56, %v220
    %v222 = vpop.f32.mrf.mxu0
    %v223 = vpop.f32.mrf.mxu0
    %v224 = vadd.f32 %v56, %v223
    %v225 = vpop.f32.mrf.mxu0
    %226 = vmatprep.mubr.bf16.mxu0 0
    %227 = vmatmul.mubr.bf16.gmra.mxu0 %v95
    %v228 = vpop.f32.mrf.mxu0
    %v229 = vadd.f32 %v56, %v228
    %v230 = vpop.f32.mrf.mxu0
    %v231 = vpop.f32.mrf.mxu0
    %v232 = vadd.f32 %v56, %v231
    %v233 = vpop.f32.mrf.mxu0
    %234 = vmatprep.mubr.bf16.mxu0 0
    %235 = vmatmul.mubr.bf16.gmra.mxu0 %v96
    %v236 = vpop.f32.mrf.mxu0
    %v237 = vadd.f32 %v56, %v236
    %v238 = vpop.f32.mrf.mxu0
    %v239 = vpop.f32.mrf.mxu0
    %v240 = vadd.f32 %v56, %v239
    %v241 = vpop.f32.mrf.mxu0
    %242 = vmatprep.mubr.bf16.mxu0 0
    %243 = vmatmul.mubr.bf16.gmra.mxu0 %v97
    %v244 = vpop.f32.mrf.mxu0
    %v245 = vadd.f32 %v56, %v244
    %v246 = vpop.f32.mrf.mxu0
    %v247 = vpop.f32.mrf.mxu0
    %v248 = vadd.f32 %v56, %v247
    %v249 = vpop.f32.mrf.mxu0
    %250 = vdwg.mxu0
    %v251 = vld [vmem:[%s3] sm:$0xf]
    %v252 = vld [vmem:[%s3 + $0x4] sm:$0xf]
    %v253 = vld [vmem:[%s3 + $0x8] sm:$0xf]
    %v254 = vld [vmem:[%s3 + $0xc] sm:$0xf]
    %v255 = vld [vmem:[%s3 + $0x10] sm:$0xf]
    %v256 = vld [vmem:[%s3 + $0x14] sm:$0xf]
    %v257 = vld [vmem:[%s3 + $0x18] sm:$0xf]
    %v258 = vld [vmem:[%s3 + $0x1c] sm:$0xf]
    %v259 = vld [vmem:[%s3 + $0x20] sm:$0xf]
    %v260 = vld [vmem:[%s3 + $0x24] sm:$0xf]
    %v261 = vld [vmem:[%s3 + $0x28] sm:$0xf]
    %v262 = vld [vmem:[%s3 + $0x2c] sm:$0xf]
    %v263 = vld [vmem:[%s3 + $0x30] sm:$0xf]
    %v264 = vld [vmem:[%s3 + $0x34] sm:$0xf]
    %v265 = vld [vmem:[%s3 + $0x38] sm:$0xf]
    %v266 = vld [vmem:[%s3 + $0x3c] sm:$0xf]
    %v267 = vunpack.c.l.bf16 %v251
    %v268 = vunpack.c.l.bf16 %v252
    %v269 = vunpack.c.l.bf16 %v253
    %v270 = vunpack.c.l.bf16 %v254
    %v271 = vunpack.c.l.bf16 %v255
    %v272 = vunpack.c.l.bf16 %v256
    %v273 = vunpack.c.l.bf16 %v257
    %v274 = vunpack.c.l.bf16 %v258
    %v275 = vunpack.c.l.bf16 %v259
    %v276 = vunpack.c.l.bf16 %v260
    %v277 = vunpack.c.l.bf16 %v261
    %v278 = vunpack.c.l.bf16 %v262
    %v279 = vunpack.c.l.bf16 %v263
    %v280 = vunpack.c.l.bf16 %v264
    %v281 = vunpack.c.l.bf16 %v265
    %v282 = vunpack.c.l.bf16 %v266
    %v283 = vadd.f32 %v189, %v267
    %v284 = vadd.f32 %v192, %v268
    %v285 = vadd.f32 %v197, %v269
    %v286 = vadd.f32 %v200, %v270
    %v287 = vadd.f32 %v205, %v271
    %v288 = vadd.f32 %v208, %v272
    %v289 = vadd.f32 %v213, %v273
    %v290 = vadd.f32 %v216, %v274
    %v291 = vadd.f32 %v221, %v275
    %v292 = vadd.f32 %v224, %v276
    %v293 = vadd.f32 %v229, %v277
    %v294 = vadd.f32 %v232, %v278
    %v295 = vadd.f32 %v237, %v279
    %v296 = vadd.f32 %v240, %v280
    %v297 = vadd.f32 %v245, %v281
    %v298 = vadd.f32 %v248, %v282
    %v299 = vmax.f32 %v283, 0.0
    %v300 = vmax.f32 %v284, 0.0
    %v301 = vmax.f32 %v285, 0.0
    %v302 = vmax.f32 %v286, 0.0
    %v303 = vmax.f32 %v287, 0.0
    %v304 = vmax.f32 %v288, 0.0
    %v305 = vmax.f32 %v289, 0.0
    %v306 = vmax.f32 %v290, 0.0
    %v307 = vmax.f32 %v291, 0.0
    %v308 = vmax.f32 %v292, 0.0
    %v309 = vmax.f32 %v293, 0.0
    %v310 = vmax.f32 %v294, 0.0
    %v311 = vmax.f32 %v295, 0.0
    %v312 = vmax.f32 %v296, 0.0
    %v313 = vmax.f32 %v297, 0.0
    %v314 = vmax.f32 %v298, 0.0
    %315 = vst [vmem:[#allocation2] sm:$0xff] %v299
    %316 = vst [vmem:[#allocation2 + $0x8] sm:$0xff] %v300
    %317 = vst [vmem:[#allocation2 + $0x10] sm:$0xff] %v301
    %318 = vst [vmem:[#allocation2 + $0x18] sm:$0xff] %v302
    %319 = vst [vmem:[#allocation2 + $0x20] sm:$0xff] %v303
    %320 = vst [vmem:[#allocation2 + $0x28] sm:$0xff] %v304
    %321 = vst [vmem:[#allocation2 + $0x30] sm:$0xff] %v305
    %322 = vst [vmem:[#allocation2 + $0x38] sm:$0xff] %v306
    %323 = vst [vmem:[#allocation2 + $0x40] sm:$0xff] %v307
    %324 = vst [vmem:[#allocation2 + $0x48] sm:$0xff] %v308
    %325 = vst [vmem:[#allocation2 + $0x50] sm:$0xff] %v309
    %326 = vst [vmem:[#allocation2 + $0x58] sm:$0xff] %v310
    %327 = vst [vmem:[#allocation2 + $0x60] sm:$0xff] %v311
    %328 = vst [vmem:[#allocation2 + $0x68] sm:$0xff] %v312
    %329 = vst [vmem:[#allocation2 + $0x70] sm:$0xff] %v313
    %330 = vst [vmem:[#allocation2 + $0x78] sm:$0xff] %v314
    // Predicated region
    $region18: #{bottleneck_forward.7} parent=1 // pred_check
      _
    $region19: #{bottleneck_forward.7} parent=1 // pred_check_branch
      %332 = sbr.rel (0) target = $region21
    $region20: #{bottleneck_forward.7} parent=1 // pred_region
      %s334 = ssub.s32 2048, 2048
      %335 = vsyncadd [#allocation3], %s334
      %s336 = sshll.u32 [#allocation2], 4
      %s337 = int_to_ptr.vmem [resolvable:$true] %s336
      %342 = dma.vmem_to_hbm [thread:$0]  %s337, 2048, %s4, [#allocation3], 128, 128, 8
    $region21: #{bottleneck_forward.7} parent=1 // pred_fallthru
      _
    // Predicated region
    $region22: #{bottleneck_forward.7} parent=1 // pred_check
      _
    $region23: #{bottleneck_forward.7} parent=1 // pred_check_branch
      %344 = sbr.rel (0) target = $region25
    $region24: #{bottleneck_forward.7} parent=1 // pred_region
      %345 = dma.done [#allocation3], 2048
    $region25: #{bottleneck_forward.7} parent=1 // pred_fallthru
      _
    %346 = vsyncpa [#allocation3], 1

</llo_original>
